<compile_context>
chip_gen: v5e
topology: v5e:2x2
jax: 0.10.0
libtpu: 0.0.40
codegen_flags: <defaults>
</compile_context>

<pallas_src>
import functools

import jax
import jax.numpy as jnp
from jax import lax
from jax.experimental import pallas as pl
from jax.experimental.pallas import tpu as pltpu


def _layernorm(x, gamma, beta, eps=1e-5):
    mean = jnp.mean(x, axis=-1, keepdims=True)
    var = jnp.mean((x - mean) ** 2, axis=-1, keepdims=True)
    return (x - mean) * lax.rsqrt(var + eps) * gamma + beta


def _gelu_exact(x):
    # nn.GELU() default = exact (erf-based) GELU.
    # (v5e note: this is EUP-bound on the (TQ, 4D) tensor; switch to tanh-approx only if
    #  model parity allows.)
    return 0.5 * x * (1.0 + lax.erf(x * 0.7071067811865476))


def transformer_block_kernel(
    x_ref,
    ln1_g_ref, ln1_b_ref,
    wqkv_ref, bqkv_ref,
    wout_ref, bout_ref,
    ln2_g_ref, ln2_b_ref,
    w1_ref, b1_ref,
    w2_ref, b2_ref,
    o_ref,
    q_s, k_s, v_s,
    *, n_heads: int, tq: int,
):
    qi = pl.program_id(1)
    _, S, D = x_ref.shape
    c = D // n_heads

    # ---- once per batch element: LN1 + QKV projection for the FULL sequence ------------
    # Cached in bf16 VMEM scratch and reused by every query tile of this batch element.
    @pl.when(qi == 0)
    def _():
        xb = x_ref[0].astype(jnp.float32)                        # (S, D) f32
        h = _layernorm(xb, ln1_g_ref[0], ln1_b_ref[0]).astype(jnp.bfloat16)
        # Weight columns pre-permuted to [Q heads | K heads | V heads]; Q columns carry
        # the folded 1/sqrt(head_dim) scale.  Single bf16 cast after the f32 bias add.
        qkv = (jnp.dot(h, wqkv_ref[...], preferred_element_type=jnp.float32)
               + bqkv_ref[0]).astype(jnp.bfloat16)               # (S, 3D) bf16
        q_s[...] = qkv[:, 0 * D:1 * D]
        k_s[...] = qkv[:, 1 * D:2 * D]
        v_s[...] = qkv[:, 2 * D:3 * D]

    # ---- this query tile ----------------------------------------------------------------
    row0 = pl.multiple_of(qi * tq, tq)
    x_tile = x_ref[0, pl.ds(row0, tq), :].astype(jnp.float32)    # (TQ, D) residual, f32
    q_tile = q_s[pl.ds(row0, tq), :]                             # (TQ, D) bf16, pre-scaled

    # Attention: per-head scores/softmax/PV, then ONE full-K out-projection matmul.
    heads = []
    for hh in range(n_heads):                                    # small static H
        lo, hi = hh * c, (hh + 1) * c
        # qh @ kh^T without an explicit transpose (contract last axes of both operands).
        scores = lax.dot_general(
            q_tile[:, lo:hi], k_s[:, lo:hi],
            dimension_numbers=(((1,), (1,)), ((), ())),
            preferred_element_type=jnp.float32)                  # (TQ, S) f32
        scores = scores - jnp.max(scores, axis=-1, keepdims=True)
        e = jnp.exp(scores)
        p = e * pl.reciprocal(jnp.sum(e, axis=-1, keepdims=True), approx=True)
        heads.append(jnp.dot(p.astype(jnp.bfloat16), v_s[:, lo:hi],
                             preferred_element_type=jnp.float32))  # (TQ, c) f32

    ctx = jnp.concatenate(heads, axis=-1).astype(jnp.bfloat16)   # (TQ, D), one cast
    attn = jnp.dot(ctx, wout_ref[...],
                   preferred_element_type=jnp.float32) + bout_ref[0]

    x1 = attn + x_tile                       # residual; dropout1 = identity (eval)

    # ---- LN2 + MLP on this row tile (row-chunked by construction) ------------------------
    h2 = _layernorm(x1, ln2_g_ref[0], ln2_b_ref[0]).astype(jnp.bfloat16)
    m = jnp.dot(h2, w1_ref[...], preferred_element_type=jnp.float32) + b1_ref[0]
    m = _gelu_exact(m)                       # f32; dropout inside MLP = identity (eval)
    m = jnp.dot(m.astype(jnp.bfloat16), w2_ref[...],
                preferred_element_type=jnp.float32) + b2_ref[0]

    o_ref[0] = (m + x1).astype(o_ref.dtype)  # residual; dropout2 = identity (eval)


def prepare_params(params, n_heads):
    """One-time (weight-load time) re-layout, scale-fold and bf16 cast."""
    (ln1_g, ln1_b, w_qkv, b_qkv, w_out, b_out,
     ln2_g, ln2_b, w1, b1, w2, b2) = params
    D = w_out.shape[0]
    c = D // n_heads
    factor = 1.0 / (c ** 0.5)

    # PyTorch rearrange splits the 3*dim qkv axis as (head, qkv, c).  Permute the weight
    # columns to (qkv, head, c) so Q/K/V are contiguous D-wide lane slices in the kernel.
    w_qkv_r = w_qkv.reshape(D, n_heads, 3, c).transpose(0, 2, 1, 3).reshape(D, 3 * D)
    b_qkv_r = b_qkv.reshape(n_heads, 3, c).transpose(1, 0, 2).reshape(3 * D)

    # Fold the 1/sqrt(head_dim) softmax scale into the Q columns (free at run time).
    col_scale = jnp.concatenate([jnp.full((D,), factor, jnp.float32),
                                 jnp.ones((2 * D,), jnp.float32)])
    w_qkv_r = w_qkv_r.astype(jnp.float32) * col_scale[None, :]
    b_qkv_r = b_qkv_r.astype(jnp.float32) * col_scale

    row = lambda v: v.reshape(1, -1).astype(jnp.float32)   # TPU-friendly 2-D scalars, f32
    bf16 = lambda w: w.astype(jnp.bfloat16)                # matmul operands -> bf16

    return (row(ln1_g), row(ln1_b),
            bf16(w_qkv_r), row(b_qkv_r),
            bf16(w_out), row(b_out),
            row(ln2_g), row(ln2_b),
            bf16(w1), row(b1),
            bf16(w2), row(b2))


def _vmem_limit_bytes():
    """~3/4 of physical per-core VMEM: ~48 MiB on v7x, ~96 MiB on v5e/v6e."""
    try:
        cap = pltpu.get_tpu_info().vmem_capacity_bytes
    except Exception:
        cap = 64 * 1024 * 1024
    return int(cap * 3 // 4)


def transformer_block(x, prepared_params, n_heads, tq=None):
    B, S, D = x.shape
    if tq is None:
        tq = S if S <= 256 else 256
    assert S % tq == 0, "sequence length must be divisible by the query tile"
    assert tq == S or tq % 8 == 0, "query tile must be sublane (8) aligned"
    nq = S // tq

    (ln1_g, ln1_b, w_qkv, b_qkv, w_out, b_out,
     ln2_g, ln2_b, w1, b1, w2, b2) = prepared_params

    # Grid-invariant operands: whole array resident in VMEM, single-buffered.
    resident = pl.BlockSpec(memory_space=pltpu.MemorySpace.VMEM)

    kernel = functools.partial(transformer_block_kernel, n_heads=n_heads, tq=tq)

    return pl.pallas_call(
        kernel,
        out_shape=jax.ShapeDtypeStruct((B, S, D), x.dtype),
        grid=(B, nq),
        in_specs=[
            # x: full-sequence block per batch element (block index independent of the
            # query-tile axis -> fetched once per batch, reused by every query tile).
            pl.BlockSpec((1, S, D), lambda b, qi: (b, 0, 0)),
            resident, resident,                             # ln1 gamma/beta
            resident, resident,                             # qkv W (bf16, Q pre-scaled), b
            resident, resident,                             # out W (bf16), b
            resident, resident,                             # ln2 gamma/beta
            resident, resident,                             # mlp W1 (bf16), b1
            resident, resident,                             # mlp W2 (bf16), b2
        ],
        out_specs=pl.BlockSpec((1, tq, D), lambda b, qi: (b, qi, 0)),
        scratch_shapes=[
            pltpu.VMEM((S, D), jnp.bfloat16),               # Q (pre-scaled), per batch
            pltpu.VMEM((S, D), jnp.bfloat16),               # K
            pltpu.VMEM((S, D), jnp.bfloat16),               # V
        ],
        compiler_params=pltpu.CompilerParams(
            # Query-tile axis must be "arbitrary": it reuses the per-batch K/V scratch
            # written at qi == 0, so it has to stay sequential on one core.
            dimension_semantics=("parallel", "arbitrary"),
            vmem_limit_bytes=_vmem_limit_bytes(),
        ),
    )(x, ln1_g, ln1_b, w_qkv, b_qkv, w_out, b_out,
      ln2_g, ln2_b, w1, b1, w2, b2)


def init_params(key, dim):
    """PyTorch-layout parameters (qkv columns ordered (head, qkv, c))."""
    ks = jax.random.split(key, 8)
    scale = 0.02
    ln1_g = jnp.ones((dim,), jnp.float32)
    ln1_b = jnp.zeros((dim,), jnp.float32)
    ln2_g = jnp.ones((dim,), jnp.float32)
    ln2_b = jnp.zeros((dim,), jnp.float32)
    w_qkv = scale * jax.random.normal(ks[0], (dim, 3 * dim), jnp.float32)
    b_qkv = scale * jax.random.normal(ks[1], (3 * dim,), jnp.float32)
    w_out = scale * jax.random.normal(ks[2], (dim, dim), jnp.float32)
    b_out = scale * jax.random.normal(ks[3], (dim,), jnp.float32)
    w1 = scale * jax.random.normal(ks[4], (dim, 4 * dim), jnp.float32)
    b1 = scale * jax.random.normal(ks[5], (4 * dim,), jnp.float32)
    w2 = scale * jax.random.normal(ks[6], (4 * dim, dim), jnp.float32)
    b2 = scale * jax.random.normal(ks[7], (dim,), jnp.float32)
    return (ln1_g, ln1_b, w_qkv, b_qkv, w_out, b_out,
            ln2_g, ln2_b, w1, b1, w2, b2)


def reference_block(x, params, n_heads):
    """Pure-JAX f32 reference with exactly the PyTorch module's semantics (mask=None)."""
    (ln1_g, ln1_b, w_qkv, b_qkv, w_out, b_out,
     ln2_g, ln2_b, w1, b1, w2, b2) = params
    B, S, D = x.shape
    c = D // n_heads

    h = _layernorm(x, ln1_g, ln1_b)
    qkv = h @ w_qkv + b_qkv                                 # columns = (head, qkv, c)
    qkv = qkv.reshape(B, S, n_heads, 3, c)
    q = jnp.transpose(qkv[:, :, :, 0, :], (0, 2, 1, 3))     # (B, H, S, c)
    k = jnp.transpose(qkv[:, :, :, 1, :], (0, 2, 1, 3))
    v = jnp.transpose(qkv[:, :, :, 2, :], (0, 2, 1, 3))
    scores = jnp.einsum("bhqc,bhkc->bhqk", q, k) * (1.0 / (c ** 0.5))
    p = jax.nn.softmax(scores, axis=-1)
    ctx = jnp.einsum("bhqk,bhkc->bhqc", p, v)
    ctx = jnp.transpose(ctx, (0, 2, 1, 3)).reshape(B, S, D)
    x = ctx @ w_out + b_out + x
    h2 = _layernorm(x, ln2_g, ln2_b)
    m = _gelu_exact(h2 @ w1 + b1)
    return m @ w2 + b2 + x


if __name__ == "__main__":
    batch, seq, dim, n_heads = 2, 16, 32, 4
    key = jax.random.PRNGKey(0)
    kx, kp = jax.random.split(key)
    x = jax.random.normal(kx, (batch, seq, dim), jnp.float32)

    params = init_params(kp, dim)
    prepped = prepare_params(params, n_heads)   # one-time re-layout + scale fold + bf16

    # tq=8 -> 2 query tiles per batch element: exercises the pl.when(qi==0) K/V caching
    # and the multi-step "arbitrary" query-tile axis even at this toy size.
    out = transformer_block(x, prepped, n_heads, tq=8)
    jax.block_until_ready(out)
    assert out.shape == (batch, seq, dim)

    # Loose check vs. f32 reference (bf16 matmul operands + approx reciprocal => ~1e-3 dev.)
    ref = reference_block(x, params, n_heads)
    assert float(jnp.max(jnp.abs(out.astype(jnp.float32) - ref))) < 5e-2

    print("KERNEL_OK")
</pallas_src>

<mosaic_0001>
module attributes {stable_mosaic.version = 11 : i64} {
  func.func @transformer_block_kernel(%arg0: i32, %arg1: i32, %arg2: memref<1x16x32xf32, #tpu.memory_space<vmem>>, %arg3: memref<1x32xf32, #tpu.memory_space<vmem>>, %arg4: memref<1x32xf32, #tpu.memory_space<vmem>>, %arg5: memref<32x96xbf16, #tpu.memory_space<vmem>>, %arg6: memref<1x96xf32, #tpu.memory_space<vmem>>, %arg7: memref<32x32xbf16, #tpu.memory_space<vmem>>, %arg8: memref<1x32xf32, #tpu.memory_space<vmem>>, %arg9: memref<1x32xf32, #tpu.memory_space<vmem>>, %arg10: memref<1x32xf32, #tpu.memory_space<vmem>>, %arg11: memref<32x128xbf16, #tpu.memory_space<vmem>>, %arg12: memref<1x128xf32, #tpu.memory_space<vmem>>, %arg13: memref<128x32xbf16, #tpu.memory_space<vmem>>, %arg14: memref<1x32xf32, #tpu.memory_space<vmem>>, %arg15: memref<1x8x32xf32, #tpu.memory_space<vmem>>, %arg16: memref<16x32xbf16, #tpu.memory_space<vmem>>, %arg17: memref<16x32xbf16, #tpu.memory_space<vmem>>, %arg18: memref<16x32xbf16, #tpu.memory_space<vmem>>) attributes {dimension_semantics = [#tpu.dimension_semantics<parallel>, #tpu.dimension_semantics<arbitrary>], iteration_bounds = array<i64: 2, 2>, scalar_prefetch = 0 : i64, scratch_operands = 3 : i64, tpu.core_type = #tpu.core_type<tc>, window_params = [{transform_indices = @transform_0, window_bounds = array<i64: 1, 16, 32>}, {pipeline_mode = #tpu.pipeline_mode<synchronous>, transform_indices = @transform_1, window_bounds = array<i64: 1, 32>}, {pipeline_mode = #tpu.pipeline_mode<synchronous>, transform_indices = @transform_2, window_bounds = array<i64: 1, 32>}, {pipeline_mode = #tpu.pipeline_mode<synchronous>, transform_indices = @transform_3, window_bounds = array<i64: 32, 96>}, {pipeline_mode = #tpu.pipeline_mode<synchronous>, transform_indices = @transform_4, window_bounds = array<i64: 1, 96>}, {pipeline_mode = #tpu.pipeline_mode<synchronous>, transform_indices = @transform_5, window_bounds = array<i64: 32, 32>}, {pipeline_mode = #tpu.pipeline_mode<synchronous>, transform_indices = @transform_6, window_bounds = array<i64: 1, 32>}, {pipeline_mode = #tpu.pipeline_mode<synchronous>, transform_indices = @transform_7, window_bounds = array<i64: 1, 32>}, {pipeline_mode = #tpu.pipeline_mode<synchronous>, transform_indices = @transform_8, window_bounds = array<i64: 1, 32>}, {pipeline_mode = #tpu.pipeline_mode<synchronous>, transform_indices = @transform_9, window_bounds = array<i64: 32, 128>}, {pipeline_mode = #tpu.pipeline_mode<synchronous>, transform_indices = @transform_10, window_bounds = array<i64: 1, 128>}, {pipeline_mode = #tpu.pipeline_mode<synchronous>, transform_indices = @transform_11, window_bounds = array<i64: 128, 32>}, {pipeline_mode = #tpu.pipeline_mode<synchronous>, transform_indices = @transform_12, window_bounds = array<i64: 1, 32>}, {transform_indices = @transform_13, window_bounds = array<i64: 1, 8, 32>}]} {
    %c0_i32 = arith.constant 0 : i32
    %0 = arith.cmpi eq, %arg1, %c0_i32 : i32
    %1 = arith.extui %0 : i1 to i32
    %c0_i32_0 = arith.constant 0 : i32
    %2 = arith.cmpi ne, %1, %c0_i32_0 : i32
    scf.if %2 {
      %c0_61 = arith.constant 0 : index
      %c0_62 = arith.constant 0 : index
      %c0_63 = arith.constant 0 : index
      %140 = vector.load %arg2[%c0_61, %c0_62, %c0_63] : memref<1x16x32xf32, #tpu.memory_space<vmem>>, vector<1x16x32xf32>
      %141 = vector.shape_cast %140 : vector<1x16x32xf32> to vector<16x32xf32>
      %c0_64 = arith.constant 0 : index
      %c0_65 = arith.constant 0 : index
      %142 = vector.load %arg3[%c0_64, %c0_65] : memref<1x32xf32, #tpu.memory_space<vmem>>, vector<1x32xf32>
      %143 = vector.shape_cast %142 : vector<1x32xf32> to vector<32xf32>
      %c0_66 = arith.constant 0 : index
      %c0_67 = arith.constant 0 : index
      %144 = vector.load %arg4[%c0_66, %c0_67] : memref<1x32xf32, #tpu.memory_space<vmem>>, vector<1x32xf32>
      %145 = vector.shape_cast %144 : vector<1x32xf32> to vector<32xf32>
      %cst_68 = arith.constant dense<0.000000e+00> : vector<16xf32>
      %146 = vector.multi_reduction <add>, %141, %cst_68 [1] : vector<16x32xf32> to vector<16xf32>
      %147 = vector.shape_cast %146 : vector<16xf32> to vector<16x1xf32>
      %cst_69 = arith.constant 3.200000e+01 : f32
      %148 = vector.broadcast %cst_69 : f32 to vector<16x1xf32>
      %149 = arith.divf %147, %148 : vector<16x1xf32>
      %150 = vector.broadcast %149 : vector<16x1xf32> to vector<16x32xf32>
      %151 = arith.subf %141, %150 : vector<16x32xf32>
      %152 = arith.mulf %151, %151 : vector<16x32xf32>
      %cst_70 = arith.constant dense<0.000000e+00> : vector<16xf32>
      %153 = vector.multi_reduction <add>, %152, %cst_70 [1] : vector<16x32xf32> to vector<16xf32>
      %154 = vector.shape_cast %153 : vector<16xf32> to vector<16x1xf32>
      %cst_71 = arith.constant 3.200000e+01 : f32
      %155 = vector.broadcast %cst_71 : f32 to vector<16x1xf32>
      %156 = arith.divf %154, %155 : vector<16x1xf32>
      %157 = vector.broadcast %149 : vector<16x1xf32> to vector<16x32xf32>
      %158 = arith.subf %141, %157 : vector<16x32xf32>
      %cst_72 = arith.constant 9.99999974E-6 : f32
      %159 = vector.broadcast %cst_72 : f32 to vector<16x1xf32>
      %160 = arith.addf %156, %159 : vector<16x1xf32>
      %161 = math.rsqrt %160 : vector<16x1xf32>
      %162 = vector.broadcast %161 : vector<16x1xf32> to vector<16x32xf32>
      %163 = arith.mulf %158, %162 : vector<16x32xf32>
      %164 = vector.shape_cast %143 : vector<32xf32> to vector<1x32xf32>
      %165 = vector.broadcast %164 : vector<1x32xf32> to vector<16x32xf32>
      %166 = arith.mulf %163, %165 : vector<16x32xf32>
      %167 = vector.shape_cast %145 : vector<32xf32> to vector<1x32xf32>
      %168 = vector.broadcast %167 : vector<1x32xf32> to vector<16x32xf32>
      %169 = arith.addf %166, %168 : vector<16x32xf32>
      %170 = arith.truncf %169 : vector<16x32xf32> to vector<16x32xbf16>
      %c0_73 = arith.constant 0 : index
      %c0_74 = arith.constant 0 : index
      %171 = vector.load %arg5[%c0_73, %c0_74] : memref<32x96xbf16, #tpu.memory_space<vmem>>, vector<32x96xbf16>
      %cst_75 = arith.constant dense<0.000000e+00> : vector<16x96xf32>
      %172 = tpu.matmul %170, %171, %cst_75 {dimension_numbers = #tpu.dot_dimension_numbers<[1], [0], [0], [1], [0, 0, 1, 1], [], []>} : vector<16x32xbf16>, vector<32x96xbf16>, vector<16x96xf32> -> vector<16x96xf32>
      %c0_76 = arith.constant 0 : index
      %c0_77 = arith.constant 0 : index
      %173 = vector.load %arg6[%c0_76, %c0_77] : memref<1x96xf32, #tpu.memory_space<vmem>>, vector<1x96xf32>
      %174 = vector.shape_cast %173 : vector<1x96xf32> to vector<96xf32>
      %175 = vector.shape_cast %174 : vector<96xf32> to vector<1x96xf32>
      %176 = vector.broadcast %175 : vector<1x96xf32> to vector<16x96xf32>
      %177 = arith.addf %172, %176 : vector<16x96xf32>
      %178 = arith.truncf %177 : vector<16x96xf32> to vector<16x96xbf16>
      %179 = vector.extract_strided_slice %178 {offsets = [0, 0], sizes = [16, 32], strides = [1, 1]} : vector<16x96xbf16> to vector<16x32xbf16>
      %c0_78 = arith.constant 0 : index
      %c0_79 = arith.constant 0 : index
      %180 = vector.load %arg16[%c0_78, %c0_79] : memref<16x32xbf16, #tpu.memory_space<vmem>>, vector<16x32xbf16>
      tpu.vector_store %arg16[%c0_78, %c0_79], %179 {strides = array<i32>} : memref<16x32xbf16, #tpu.memory_space<vmem>>, vector<16x32xbf16>,
      %181 = vector.extract_strided_slice %178 {offsets = [0, 32], sizes = [16, 32], strides = [1, 1]} : vector<16x96xbf16> to vector<16x32xbf16>
      %c0_80 = arith.constant 0 : index
      %c0_81 = arith.constant 0 : index
      %182 = vector.load %arg17[%c0_80, %c0_81] : memref<16x32xbf16, #tpu.memory_space<vmem>>, vector<16x32xbf16>
      tpu.vector_store %arg17[%c0_80, %c0_81], %181 {strides = array<i32>} : memref<16x32xbf16, #tpu.memory_space<vmem>>, vector<16x32xbf16>,
      %183 = vector.extract_strided_slice %178 {offsets = [0, 64], sizes = [16, 32], strides = [1, 1]} : vector<16x96xbf16> to vector<16x32xbf16>
      %c0_82 = arith.constant 0 : index
      %c0_83 = arith.constant 0 : index
      %184 = vector.load %arg18[%c0_82, %c0_83] : memref<16x32xbf16, #tpu.memory_space<vmem>>, vector<16x32xbf16>
      tpu.vector_store %arg18[%c0_82, %c0_83], %183 {strides = array<i32>} : memref<16x32xbf16, #tpu.memory_space<vmem>>, vector<16x32xbf16>,
    } else {
    }
    %c8_i32 = arith.constant 8 : i32
    %3 = arith.muli %arg1, %c8_i32 : i32
    %4 = tpu.assume_multiple %3, 8 : i32
    %c0 = arith.constant 0 : index
    %5 = arith.index_cast %4 : i32 to index
    %c0_1 = arith.constant 0 : index
    %6 = vector.load %arg2[%c0, %5, %c0_1] : memref<1x16x32xf32, #tpu.memory_space<vmem>>, vector<1x8x32xf32>
    %7 = vector.shape_cast %6 : vector<1x8x32xf32> to vector<8x32xf32>
    %8 = arith.index_cast %4 : i32 to index
    %c0_2 = arith.constant 0 : index
    %9 = vector.load %arg16[%8, %c0_2] : memref<16x32xbf16, #tpu.memory_space<vmem>>, vector<8x32xbf16>
    %10 = vector.extract_strided_slice %9 {offsets = [0, 0], sizes = [8, 8], strides = [1, 1]} : vector<8x32xbf16> to vector<8x8xbf16>
    %c0_3 = arith.constant 0 : index
    %c0_4 = arith.constant 0 : index
    %11 = vector.load %arg17[%c0_3, %c0_4] : memref<16x32xbf16, #tpu.memory_space<vmem>>, vector<16x8xbf16>
    %cst = arith.constant dense<0.000000e+00> : vector<8x16xf32>
    %12 = tpu.matmul %10, %11, %cst {dimension_numbers = #tpu.dot_dimension_numbers<[1], [1], [0], [0], [0, 0, 1, 0], [], []>} : vector<8x8xbf16>, vector<16x8xbf16>, vector<8x16xf32> -> vector<8x16xf32>
    %cst_5 = arith.constant dense<0xFF800000> : vector<8xf32>
    %13 = vector.multi_reduction <maximumf>, %12, %cst_5 [1] : vector<8x16xf32> to vector<8xf32>
    %14 = vector.shape_cast %13 : vector<8xf32> to vector<8x1xf32>
    %15 = vector.broadcast %14 : vector<8x1xf32> to vector<8x16xf32>
    %16 = arith.subf %12, %15 : vector<8x16xf32>
    %17 = math.exp %16 : vector<8x16xf32>
    %cst_6 = arith.constant dense<0.000000e+00> : vector<8xf32>
    %18 = vector.multi_reduction <add>, %17, %cst_6 [1] : vector<8x16xf32> to vector<8xf32>
    %19 = vector.shape_cast %18 : vector<8xf32> to vector<8x1xf32>
    %20 = tpu.reciprocal %19 {approx = true} : vector<8x1xf32> -> vector<8x1xf32>
    %21 = vector.broadcast %20 : vector<8x1xf32> to vector<8x16xf32>
    %22 = arith.mulf %17, %21 : vector<8x16xf32>
    %23 = arith.truncf %22 : vector<8x16xf32> to vector<8x16xbf16>
    %c0_7 = arith.constant 0 : index
    %c0_8 = arith.constant 0 : index
    %24 = vector.load %arg18[%c0_7, %c0_8] : memref<16x32xbf16, #tpu.memory_space<vmem>>, vector<16x8xbf16>
    %cst_9 = arith.constant dense<0.000000e+00> : vector<8x8xf32>
    %25 = tpu.matmul %23, %24, %cst_9 {dimension_numbers = #tpu.dot_dimension_numbers<[1], [0], [0], [1], [0, 0, 1, 1], [], []>} : vector<8x16xbf16>, vector<16x8xbf16>, vector<8x8xf32> -> vector<8x8xf32>
    %26 = vector.extract_strided_slice %9 {offsets = [0, 8], sizes = [8, 8], strides = [1, 1]} : vector<8x32xbf16> to vector<8x8xbf16>
    %c0_10 = arith.constant 0 : index
    %c8 = arith.constant 8 : index
    %27 = vector.load %arg17[%c0_10, %c8] : memref<16x32xbf16, #tpu.memory_space<vmem>>, vector<16x8xbf16>
    %cst_11 = arith.constant dense<0.000000e+00> : vector<8x16xf32>
    %28 = tpu.matmul %26, %27, %cst_11 {dimension_numbers = #tpu.dot_dimension_numbers<[1], [1], [0], [0], [0, 0, 1, 0], [], []>} : vector<8x8xbf16>, vector<16x8xbf16>, vector<8x16xf32> -> vector<8x16xf32>
    %cst_12 = arith.constant dense<0xFF800000> : vector<8xf32>
    %29 = vector.multi_reduction <maximumf>, %28, %cst_12 [1] : vector<8x16xf32> to vector<8xf32>
    %30 = vector.shape_cast %29 : vector<8xf32> to vector<8x1xf32>
    %31 = vector.broadcast %30 : vector<8x1xf32> to vector<8x16xf32>
    %32 = arith.subf %28, %31 : vector<8x16xf32>
    %33 = math.exp %32 : vector<8x16xf32>
    %cst_13 = arith.constant dense<0.000000e+00> : vector<8xf32>
    %34 = vector.multi_reduction <add>, %33, %cst_13 [1] : vector<8x16xf32> to vector<8xf32>
    %35 = vector.shape_cast %34 : vector<8xf32> to vector<8x1xf32>
    %36 = tpu.reciprocal %35 {approx = true} : vector<8x1xf32> -> vector<8x1xf32>
    %37 = vector.broadcast %36 : vector<8x1xf32> to vector<8x16xf32>
    %38 = arith.mulf %33, %37 : vector<8x16xf32>
    %39 = arith.truncf %38 : vector<8x16xf32> to vector<8x16xbf16>
    %c0_14 = arith.constant 0 : index
    %c8_15 = arith.constant 8 : index
    %40 = vector.load %arg18[%c0_14, %c8_15] : memref<16x32xbf16, #tpu.memory_space<vmem>>, vector<16x8xbf16>
    %cst_16 = arith.constant dense<0.000000e+00> : vector<8x8xf32>
    %41 = tpu.matmul %39, %40, %cst_16 {dimension_numbers = #tpu.dot_dimension_numbers<[1], [0], [0], [1], [0, 0, 1, 1], [], []>} : vector<8x16xbf16>, vector<16x8xbf16>, vector<8x8xf32> -> vector<8x8xf32>
    %42 = vector.extract_strided_slice %9 {offsets = [0, 16], sizes = [8, 8], strides = [1, 1]} : vector<8x32xbf16> to vector<8x8xbf16>
    %c0_17 = arith.constant 0 : index
    %c16 = arith.constant 16 : index
    %43 = vector.load %arg17[%c0_17, %c16] : memref<16x32xbf16, #tpu.memory_space<vmem>>, vector<16x8xbf16>
    %cst_18 = arith.constant dense<0.000000e+00> : vector<8x16xf32>
    %44 = tpu.matmul %42, %43, %cst_18 {dimension_numbers = #tpu.dot_dimension_numbers<[1], [1], [0], [0], [0, 0, 1, 0], [], []>} : vector<8x8xbf16>, vector<16x8xbf16>, vector<8x16xf32> -> vector<8x16xf32>
    %cst_19 = arith.constant dense<0xFF800000> : vector<8xf32>
    %45 = vector.multi_reduction <maximumf>, %44, %cst_19 [1] : vector<8x16xf32> to vector<8xf32>
    %46 = vector.shape_cast %45 : vector<8xf32> to vector<8x1xf32>
    %47 = vector.broadcast %46 : vector<8x1xf32> to vector<8x16xf32>
    %48 = arith.subf %44, %47 : vector<8x16xf32>
    %49 = math.exp %48 : vector<8x16xf32>
    %cst_20 = arith.constant dense<0.000000e+00> : vector<8xf32>
    %50 = vector.multi_reduction <add>, %49, %cst_20 [1] : vector<8x16xf32> to vector<8xf32>
    %51 = vector.shape_cast %50 : vector<8xf32> to vector<8x1xf32>
    %52 = tpu.reciprocal %51 {approx = true} : vector<8x1xf32> -> vector<8x1xf32>
    %53 = vector.broadcast %52 : vector<8x1xf32> to vector<8x16xf32>
    %54 = arith.mulf %49, %53 : vector<8x16xf32>
    %55 = arith.truncf %54 : vector<8x16xf32> to vector<8x16xbf16>
    %c0_21 = arith.constant 0 : index
    %c16_22 = arith.constant 16 : index
    %56 = vector.load %arg18[%c0_21, %c16_22] : memref<16x32xbf16, #tpu.memory_space<vmem>>, vector<16x8xbf16>
    %cst_23 = arith.constant dense<0.000000e+00> : vector<8x8xf32>
    %57 = tpu.matmul %55, %56, %cst_23 {dimension_numbers = #tpu.dot_dimension_numbers<[1], [0], [0], [1], [0, 0, 1, 1], [], []>} : vector<8x16xbf16>, vector<16x8xbf16>, vector<8x8xf32> -> vector<8x8xf32>
    %58 = vector.extract_strided_slice %9 {offsets = [0, 24], sizes = [8, 8], strides = [1, 1]} : vector<8x32xbf16> to vector<8x8xbf16>
    %c0_24 = arith.constant 0 : index
    %c24 = arith.constant 24 : index
    %59 = vector.load %arg17[%c0_24, %c24] : memref<16x32xbf16, #tpu.memory_space<vmem>>, vector<16x8xbf16>
    %cst_25 = arith.constant dense<0.000000e+00> : vector<8x16xf32>
    %60 = tpu.matmul %58, %59, %cst_25 {dimension_numbers = #tpu.dot_dimension_numbers<[1], [1], [0], [0], [0, 0, 1, 0], [], []>} : vector<8x8xbf16>, vector<16x8xbf16>, vector<8x16xf32> -> vector<8x16xf32>
    %cst_26 = arith.constant dense<0xFF800000> : vector<8xf32>
    %61 = vector.multi_reduction <maximumf>, %60, %cst_26 [1] : vector<8x16xf32> to vector<8xf32>
    %62 = vector.shape_cast %61 : vector<8xf32> to vector<8x1xf32>
    %63 = vector.broadcast %62 : vector<8x1xf32> to vector<8x16xf32>
    %64 = arith.subf %60, %63 : vector<8x16xf32>
    %65 = math.exp %64 : vector<8x16xf32>
    %cst_27 = arith.constant dense<0.000000e+00> : vector<8xf32>
    %66 = vector.multi_reduction <add>, %65, %cst_27 [1] : vector<8x16xf32> to vector<8xf32>
    %67 = vector.shape_cast %66 : vector<8xf32> to vector<8x1xf32>
    %68 = tpu.reciprocal %67 {approx = true} : vector<8x1xf32> -> vector<8x1xf32>
    %69 = vector.broadcast %68 : vector<8x1xf32> to vector<8x16xf32>
    %70 = arith.mulf %65, %69 : vector<8x16xf32>
    %71 = arith.truncf %70 : vector<8x16xf32> to vector<8x16xbf16>
    %c0_28 = arith.constant 0 : index
    %c24_29 = arith.constant 24 : index
    %72 = vector.load %arg18[%c0_28, %c24_29] : memref<16x32xbf16, #tpu.memory_space<vmem>>, vector<16x8xbf16>
    %cst_30 = arith.constant dense<0.000000e+00> : vector<8x8xf32>
    %73 = tpu.matmul %71, %72, %cst_30 {dimension_numbers = #tpu.dot_dimension_numbers<[1], [0], [0], [1], [0, 0, 1, 1], [], []>} : vector<8x16xbf16>, vector<16x8xbf16>, vector<8x8xf32> -> vector<8x8xf32>
    %74 = tpu.concatenate %25, %41, %57, %73 in 1 : vector<8x8xf32>, vector<8x8xf32>, vector<8x8xf32>, vector<8x8xf32> -> vector<8x32xf32>
    %75 = arith.truncf %74 : vector<8x32xf32> to vector<8x32xbf16>
    %c0_31 = arith.constant 0 : index
    %c0_32 = arith.constant 0 : index
    %76 = vector.load %arg7[%c0_31, %c0_32] : memref<32x32xbf16, #tpu.memory_space<vmem>>, vector<32x32xbf16>
    %cst_33 = arith.constant dense<0.000000e+00> : vector<8x32xf32>
    %77 = tpu.matmul %75, %76, %cst_33 {dimension_numbers = #tpu.dot_dimension_numbers<[1], [0], [0], [1], [0, 0, 1, 1], [], []>} : vector<8x32xbf16>, vector<32x32xbf16>, vector<8x32xf32> -> vector<8x32xf32>
    %c0_34 = arith.constant 0 : index
    %c0_35 = arith.constant 0 : index
    %78 = vector.load %arg8[%c0_34, %c0_35] : memref<1x32xf32, #tpu.memory_space<vmem>>, vector<1x32xf32>
    %79 = vector.shape_cast %78 : vector<1x32xf32> to vector<32xf32>
    %80 = vector.shape_cast %79 : vector<32xf32> to vector<1x32xf32>
    %81 = vector.broadcast %80 : vector<1x32xf32> to vector<8x32xf32>
    %82 = arith.addf %77, %81 : vector<8x32xf32>
    %83 = arith.addf %82, %7 : vector<8x32xf32>
    %c0_36 = arith.constant 0 : index
    %c0_37 = arith.constant 0 : index
    %84 = vector.load %arg9[%c0_36, %c0_37] : memref<1x32xf32, #tpu.memory_space<vmem>>, vector<1x32xf32>
    %85 = vector.shape_cast %84 : vector<1x32xf32> to vector<32xf32>
    %c0_38 = arith.constant 0 : index
    %c0_39 = arith.constant 0 : index
    %86 = vector.load %arg10[%c0_38, %c0_39] : memref<1x32xf32, #tpu.memory_space<vmem>>, vector<1x32xf32>
    %87 = vector.shape_cast %86 : vector<1x32xf32> to vector<32xf32>
    %cst_40 = arith.constant dense<0.000000e+00> : vector<8xf32>
    %88 = vector.multi_reduction <add>, %83, %cst_40 [1] : vector<8x32xf32> to vector<8xf32>
    %89 = vector.shape_cast %88 : vector<8xf32> to vector<8x1xf32>
    %cst_41 = arith.constant 3.200000e+01 : f32
    %90 = vector.broadcast %cst_41 : f32 to vector<8x1xf32>
    %91 = arith.divf %89, %90 : vector<8x1xf32>
    %92 = vector.broadcast %91 : vector<8x1xf32> to vector<8x32xf32>
    %93 = arith.subf %83, %92 : vector<8x32xf32>
    %94 = arith.mulf %93, %93 : vector<8x32xf32>
    %cst_42 = arith.constant dense<0.000000e+00> : vector<8xf32>
    %95 = vector.multi_reduction <add>, %94, %cst_42 [1] : vector<8x32xf32> to vector<8xf32>
    %96 = vector.shape_cast %95 : vector<8xf32> to vector<8x1xf32>
    %cst_43 = arith.constant 3.200000e+01 : f32
    %97 = vector.broadcast %cst_43 : f32 to vector<8x1xf32>
    %98 = arith.divf %96, %97 : vector<8x1xf32>
    %99 = vector.broadcast %91 : vector<8x1xf32> to vector<8x32xf32>
    %100 = arith.subf %83, %99 : vector<8x32xf32>
    %cst_44 = arith.constant 9.99999974E-6 : f32
    %101 = vector.broadcast %cst_44 : f32 to vector<8x1xf32>
    %102 = arith.addf %98, %101 : vector<8x1xf32>
    %103 = math.rsqrt %102 : vector<8x1xf32>
    %104 = vector.broadcast %103 : vector<8x1xf32> to vector<8x32xf32>
    %105 = arith.mulf %100, %104 : vector<8x32xf32>
    %106 = vector.shape_cast %85 : vector<32xf32> to vector<1x32xf32>
    %107 = vector.broadcast %106 : vector<1x32xf32> to vector<8x32xf32>
    %108 = arith.mulf %105, %107 : vector<8x32xf32>
    %109 = vector.shape_cast %87 : vector<32xf32> to vector<1x32xf32>
    %110 = vector.broadcast %109 : vector<1x32xf32> to vector<8x32xf32>
    %111 = arith.addf %108, %110 : vector<8x32xf32>
    %112 = arith.truncf %111 : vector<8x32xf32> to vector<8x32xbf16>
    %c0_45 = arith.constant 0 : index
    %c0_46 = arith.constant 0 : index
    %113 = vector.load %arg11[%c0_45, %c0_46] : memref<32x128xbf16, #tpu.memory_space<vmem>>, vector<32x128xbf16>
    %cst_47 = arith.constant dense<0.000000e+00> : vector<8x128xf32>
    %114 = tpu.matmul %112, %113, %cst_47 {dimension_numbers = #tpu.dot_dimension_numbers<[1], [0], [0], [1], [0, 0, 1, 1], [], []>} : vector<8x32xbf16>, vector<32x128xbf16>, vector<8x128xf32> -> vector<8x128xf32>
    %c0_48 = arith.constant 0 : index
    %c0_49 = arith.constant 0 : index
    %115 = vector.load %arg12[%c0_48, %c0_49] : memref<1x128xf32, #tpu.memory_space<vmem>>, vector<1x128xf32>
    %116 = vector.shape_cast %115 : vector<1x128xf32> to vector<128xf32>
    %117 = vector.shape_cast %116 : vector<128xf32> to vector<1x128xf32>
    %118 = vector.broadcast %117 : vector<1x128xf32> to vector<8x128xf32>
    %119 = arith.addf %114, %118 : vector<8x128xf32>
    %cst_50 = arith.constant 5.000000e-01 : f32
    %120 = vector.broadcast %cst_50 : f32 to vector<8x128xf32>
    %121 = arith.mulf %120, %119 : vector<8x128xf32>
    %cst_51 = arith.constant 0.707106769 : f32
    %122 = vector.broadcast %cst_51 : f32 to vector<8x128xf32>
    %123 = arith.mulf %119, %122 : vector<8x128xf32>
    %124 = math.erf %123 : vector<8x128xf32>
    %cst_52 = arith.constant 1.000000e+00 : f32
    %125 = vector.broadcast %cst_52 : f32 to vector<8x128xf32>
    %126 = arith.addf %125, %124 : vector<8x128xf32>
    %127 = arith.mulf %121, %126 : vector<8x128xf32>
    %128 = arith.truncf %127 : vector<8x128xf32> to vector<8x128xbf16>
    %c0_53 = arith.constant 0 : index
    %c0_54 = arith.constant 0 : index
    %129 = vector.load %arg13[%c0_53, %c0_54] : memref<128x32xbf16, #tpu.memory_space<vmem>>, vector<128x32xbf16>
    %cst_55 = arith.constant dense<0.000000e+00> : vector<8x32xf32>
    %130 = tpu.matmul %128, %129, %cst_55 {dimension_numbers = #tpu.dot_dimension_numbers<[1], [0], [0], [1], [0, 0, 1, 1], [], []>} : vector<8x128xbf16>, vector<128x32xbf16>, vector<8x32xf32> -> vector<8x32xf32>
    %c0_56 = arith.constant 0 : index
    %c0_57 = arith.constant 0 : index
    %131 = vector.load %arg14[%c0_56, %c0_57] : memref<1x32xf32, #tpu.memory_space<vmem>>, vector<1x32xf32>
    %132 = vector.shape_cast %131 : vector<1x32xf32> to vector<32xf32>
    %133 = vector.shape_cast %132 : vector<32xf32> to vector<1x32xf32>
    %134 = vector.broadcast %133 : vector<1x32xf32> to vector<8x32xf32>
    %135 = arith.addf %130, %134 : vector<8x32xf32>
    %136 = arith.addf %135, %83 : vector<8x32xf32>
    %c0_58 = arith.constant 0 : index
    %c0_59 = arith.constant 0 : index
    %c0_60 = arith.constant 0 : index
    %137 = vector.load %arg15[%c0_58, %c0_59, %c0_60] : memref<1x8x32xf32, #tpu.memory_space<vmem>>, vector<1x8x32xf32>
    %138 = vector.shape_cast %137 : vector<1x8x32xf32> to vector<8x32xf32>
    %139 = vector.shape_cast %136 : vector<8x32xf32> to vector<1x8x32xf32>
    tpu.vector_store %arg15[%c0_58, %c0_59, %c0_60], %139 {strides = array<i32>} : memref<1x8x32xf32, #tpu.memory_space<vmem>>, vector<1x8x32xf32>,
    return
  }
  func.func @transform_0(%arg0: i32, %arg1: i32) -> (i32, i32, i32) {
    %c0_i32 = arith.constant 0 : i32
    %c0_i32_0 = arith.constant 0 : i32
    %c0_i32_1 = arith.constant 0 : i32
    return %arg0, %c0_i32, %c0_i32_0 : i32, i32, i32
  }
  func.func @transform_1(%arg0: i32, %arg1: i32) -> (i32, i32) {
    %c0_i32 = arith.constant 0 : i32
    %c0_i32_0 = arith.constant 0 : i32
    %c0_i32_1 = arith.constant 0 : i32
    return %c0_i32, %c0_i32_0 : i32, i32
  }
  func.func @transform_2(%arg0: i32, %arg1: i32) -> (i32, i32) {
    %c0_i32 = arith.constant 0 : i32
    %c0_i32_0 = arith.constant 0 : i32
    %c0_i32_1 = arith.constant 0 : i32
    return %c0_i32, %c0_i32_0 : i32, i32
  }
  func.func @transform_3(%arg0: i32, %arg1: i32) -> (i32, i32) {
    %c0_i32 = arith.constant 0 : i32
    %c0_i32_0 = arith.constant 0 : i32
    %c0_i32_1 = arith.constant 0 : i32
    return %c0_i32, %c0_i32_0 : i32, i32
  }
  func.func @transform_4(%arg0: i32, %arg1: i32) -> (i32, i32) {
    %c0_i32 = arith.constant 0 : i32
    %c0_i32_0 = arith.constant 0 : i32
    %c0_i32_1 = arith.constant 0 : i32
    return %c0_i32, %c0_i32_0 : i32, i32
  }
  func.func @transform_5(%arg0: i32, %arg1: i32) -> (i32, i32) {
    %c0_i32 = arith.constant 0 : i32
    %c0_i32_0 = arith.constant 0 : i32
    %c0_i32_1 = arith.constant 0 : i32
    return %c0_i32, %c0_i32_0 : i32, i32
  }
  func.func @transform_6(%arg0: i32, %arg1: i32) -> (i32, i32) {
    %c0_i32 = arith.constant 0 : i32
    %c0_i32_0 = arith.constant 0 : i32
    %c0_i32_1 = arith.constant 0 : i32
    return %c0_i32, %c0_i32_0 : i32, i32
  }
  func.func @transform_7(%arg0: i32, %arg1: i32) -> (i32, i32) {
    %c0_i32 = arith.constant 0 : i32
    %c0_i32_0 = arith.constant 0 : i32
    %c0_i32_1 = arith.constant 0 : i32
    return %c0_i32, %c0_i32_0 : i32, i32
  }
  func.func @transform_8(%arg0: i32, %arg1: i32) -> (i32, i32) {
    %c0_i32 = arith.constant 0 : i32
    %c0_i32_0 = arith.constant 0 : i32
    %c0_i32_1 = arith.constant 0 : i32
    return %c0_i32, %c0_i32_0 : i32, i32
  }
  func.func @transform_9(%arg0: i32, %arg1: i32) -> (i32, i32) {
    %c0_i32 = arith.constant 0 : i32
    %c0_i32_0 = arith.constant 0 : i32
    %c0_i32_1 = arith.constant 0 : i32
    return %c0_i32, %c0_i32_0 : i32, i32
  }
  func.func @transform_10(%arg0: i32, %arg1: i32) -> (i32, i32) {
    %c0_i32 = arith.constant 0 : i32
    %c0_i32_0 = arith.constant 0 : i32
    %c0_i32_1 = arith.constant 0 : i32
    return %c0_i32, %c0_i32_0 : i32, i32
  }
  func.func @transform_11(%arg0: i32, %arg1: i32) -> (i32, i32) {
    %c0_i32 = arith.constant 0 : i32
    %c0_i32_0 = arith.constant 0 : i32
    %c0_i32_1 = arith.constant 0 : i32
    return %c0_i32, %c0_i32_0 : i32, i32
  }
  func.func @transform_12(%arg0: i32, %arg1: i32) -> (i32, i32) {
    %c0_i32 = arith.constant 0 : i32
    %c0_i32_0 = arith.constant 0 : i32
    %c0_i32_1 = arith.constant 0 : i32
    return %c0_i32, %c0_i32_0 : i32, i32
  }
  func.func @transform_13(%arg0: i32, %arg1: i32) -> (i32, i32, i32) {
    %c0_i32 = arith.constant 0 : i32
    %c0_i32_0 = arith.constant 0 : i32
    return %arg0, %arg1, %c0_i32 : i32, i32, i32
  }
}

</mosaic_0001>

<llo_original>
// kernel: tpu_custom_call.1
$region0: #{tpu_custom_call.1}
  #allocation0 [shape = 'u32[]', space=smem, size = 0x4, offset = 0x4, fixed_abs, tag = 'smem constant byte address 0x4 - core index']
  #allocation1 [shape = 'u32[72,128]{1,0:T(1,128)}', space=vmem, size = 0x9000, scoped, tag = 'internal scratch']
  #allocation2 [shape = 'bf16[16,32]{1,0:T(8,128)(2,1)}', space=vmem, size = 0x1000, scoped, tag = 'scratch operand']
  #allocation3 [shape = 'bf16[16,32]{1,0:T(8,128)(2,1)}', space=vmem, size = 0x1000, scoped, tag = 'scratch operand']
  #allocation4 [shape = 'bf16[16,32]{1,0:T(8,128)(2,1)}', space=vmem, size = 0x1000, scoped, tag = 'scratch operand']
  %s0 = inlined_call_operand.vmem [shape: f32[2,16,32], index: 0, kind: input, shape index: {}]
  %s1 = inlined_call_operand.hbm [shape: f32[1,32], index: 1, kind: input, shape index: {}]
  %s2 = inlined_call_operand.vmem [shape: f32[1,32], index: 2, kind: input, shape index: {}]
  %s3 = inlined_call_operand.vmem [shape: bf16[32,96], index: 3, kind: input, shape index: {}]
  %s4 = inlined_call_operand.vmem [shape: f32[1,96], index: 4, kind: input, shape index: {}]
  %s5 = inlined_call_operand.vmem [shape: bf16[32,32], index: 5, kind: input, shape index: {}]
  %s6 = inlined_call_operand.vmem [shape: f32[1,32], index: 6, kind: input, shape index: {}]
  %s7 = inlined_call_operand.vmem [shape: f32[1,32], index: 7, kind: input, shape index: {}]
  %s8 = inlined_call_operand.vmem [shape: f32[1,32], index: 8, kind: input, shape index: {}]
  %s9 = inlined_call_operand.vmem [shape: bf16[32,128], index: 9, kind: input, shape index: {}]
  %s10 = inlined_call_operand.vmem [shape: f32[1,128], index: 10, kind: input, shape index: {}]
  %s11 = inlined_call_operand.vmem [shape: bf16[128,32], index: 11, kind: input, shape index: {}]
  %s12 = inlined_call_operand.vmem [shape: f32[1,32], index: 12, kind: input, shape index: {}]
  %s13 = inlined_call_operand.hbm [shape: f32[2,16,32], index: 13, kind: output, shape index: {}]
  %s14 = sld [smem:[#allocation0]]
  $region93: #{tpu_custom_call.1} parent=0
    _
  %s16 = ssub.s32 1, %s14
  %s17 = scalar_select 0, %s16, %s14
  $region1: #{tpu_custom_call.1} parent=0
    #allocation5 [shape = 'u8[512]{0}', space=vmem, size = 0x400, scoped, tag = 'input window, operand 1, single buffered']
    #allocation6 [shape = 's32[2]{0}', space=sflag, size = 0x8, scoped, tag = 'scoped memory for tpu_custom_call.1']
    #allocation7 [shape = 's32[2]{0}', space=sflag, size = 0x8, scoped, tag = 'scoped memory for tpu_custom_call.1']
    #allocation8 [shape = 'u8[8192]{0}', space=vmem, size = 0x2000, scoped, tag = 'output window, operand 0']
    %18 = vsyncpa [#allocation6], 0
    %19 = vsyncpa [#allocation7], 0
    %s20 = scalar_lea.sflag [#allocation7], 1
    %21 = vsyncpa %s20, 0
    loop: start=0, step=1, limit=6
    $region2: #{tpu_custom_call.1} parent=1 // loop_pre_header
      _
    $region3: #{tpu_custom_call.1} parent=1 // loop_header
      %s23 = sphi 0, %s27
      %p24 = scmp.ge.s32.totalorder %s23, 6
      %s30 = sphi 0, %s42
      %s31 = sphi 0, %s38
      %s32 = sphi 0, %s30
      %s33 = sphi 0, %s31
      %s34 = sphi 0, %s32
      %s35 = sphi 0, %s33
      %s45 = sphi 0, %s47
      %s48 = sphi 0, %s45
      %s49 = sphi 0, %s48
      %s65 = sphi 0, %s49
      %s69 = sphi 0, %s69
      %s71 = sphi 0, %s69
      %s72 = sphi 0, %s71
      %s86 = sphi 0, %s72
      %s90 = sphi 0, %s90
      %s92 = sphi 0, %s90
      %s93 = sphi 0, %s92
      %s107 = sphi 0, %s93
      %s111 = sphi 0, %s111
      %s113 = sphi 0, %s111
      %s114 = sphi 0, %s113
      %s128 = sphi 0, %s114
      %s132 = sphi 0, %s132
      %s134 = sphi 0, %s132
      %s135 = sphi 0, %s134
      %s149 = sphi 0, %s135
      %s153 = sphi 0, %s153
      %s155 = sphi 0, %s153
      %s156 = sphi 0, %s155
      %s170 = sphi 0, %s156
      %s174 = sphi 0, %s174
      %s176 = sphi 0, %s174
      %s177 = sphi 0, %s176
      %s191 = sphi 0, %s177
      %s195 = sphi 0, %s195
      %s197 = sphi 0, %s195
      %s198 = sphi 0, %s197
      %s212 = sphi 0, %s198
      %s216 = sphi 0, %s216
      %s218 = sphi 0, %s216
      %s219 = sphi 0, %s218
      %s233 = sphi 0, %s219
      %s237 = sphi 0, %s237
      %s239 = sphi 0, %s237
      %s240 = sphi 0, %s239
      %s254 = sphi 0, %s240
      %s258 = sphi 0, %s258
      %s260 = sphi 0, %s258
      %s261 = sphi 0, %s260
      %s275 = sphi 0, %s261
      %s279 = sphi 0, %s279
      %s281 = sphi 0, %s279
      %s282 = sphi 0, %s281
      %s296 = sphi 0, %s282
      %s300 = sphi 0, %s300
      %s302 = sphi 0, %s300
      %s303 = sphi 0, %s302
      %s317 = sphi 0, %s303
      %s325 = sphi 0, %s327
      %s328 = sphi 0, %s325
      %s329 = sphi 0, %s328
      %s345 = sphi 0, %s329
    $region4: #{tpu_custom_call.1} parent=1 // loop_header_branch
      %26 = sbr.rel (%p24) target = $region8
    $region5: #{tpu_custom_call.1} parent=1 // loop_body
      %s28 = ssub.s32 %s23, 1
      %s29 = ssub.s32 %s23, 2
      %s36 = sadd.s32 1, %s31
      %p37 = scmp.ge.s32.totalorder %s36, 2
      %s38 = scalar_select %p37, 0, %s36
      %s39 = sadd.s32 1, %s30
      %s40 = scalar_select %p37, %s39, %s30
      %p41 = scmp.ge.s32.totalorder %s40, 2
      %s42 = scalar_select %p41, 0, %s40
      %s43 = ssub.s32 %s30, %s42
      %p44 = scmp.eq.s32.totalorder %s43, 0
      %s46 = sadd.s32 %s45, 1
      %s47 = scalar_select %p44, %s45, %s46
      %p50 = pneg %p44
      %p51 = scmp.eq.s32.totalorder %s23, 3
      %p52 = por %p50, %p51
      %p53 = scmp.ne.s32.totalorder %s45, %s48
      %p54 = scmp.eq.s32.totalorder %s23, 0
      %p55 = por %p53, %p54
      %p56 = scmp.ne.s32.totalorder %s45, %s48
      %p57 = scmp.eq.s32.totalorder %s28, 3
      %p58 = por %p56, %p57
      %p59 = scmp.ne.s32.totalorder %s48, %s49
      %p60 = scmp.eq.s32.totalorder %s28, 0
      %p61 = por %p59, %p60
      %p62 = scmp.ne.s32.totalorder %s48, %s49
      %p63 = scmp.eq.s32.totalorder %s29, 3
      %p64 = por %p62, %p63
      %p66 = scmp.ne.s32.totalorder %s49, %s65
      %p67 = scmp.eq.s32.totalorder %s29, 0
      %p68 = por %p66, %p67
      %s70 = sadd.s32 %s69, 1
      %p73 = scmp.eq.s32.totalorder %s23, 3
      %p74 = scmp.ne.s32.totalorder %s69, %s71
      %p75 = scmp.eq.s32.totalorder %s23, 0
      %p76 = por %p74, %p75
      %p77 = scmp.ne.s32.totalorder %s69, %s71
      %p78 = scmp.eq.s32.totalorder %s28, 3
      %p79 = por %p77, %p78
      %p80 = scmp.ne.s32.totalorder %s71, %s72
      %p81 = scmp.eq.s32.totalorder %s28, 0
      %p82 = por %p80, %p81
      %p83 = scmp.ne.s32.totalorder %s71, %s72
      %p84 = scmp.eq.s32.totalorder %s29, 3
      %p85 = por %p83, %p84
      %p87 = scmp.ne.s32.totalorder %s72, %s86
      %p88 = scmp.eq.s32.totalorder %s29, 0
      %p89 = por %p87, %p88
      %s91 = sadd.s32 %s90, 1
      %p94 = scmp.eq.s32.totalorder %s23, 3
      %p95 = scmp.ne.s32.totalorder %s90, %s92
      %p96 = scmp.eq.s32.totalorder %s23, 0
      %p97 = por %p95, %p96
      %p98 = scmp.ne.s32.totalorder %s90, %s92
      %p99 = scmp.eq.s32.totalorder %s28, 3
      %p100 = por %p98, %p99
      %p101 = scmp.ne.s32.totalorder %s92, %s93
      %p102 = scmp.eq.s32.totalorder %s28, 0
      %p103 = por %p101, %p102
      %p104 = scmp.ne.s32.totalorder %s92, %s93
      %p105 = scmp.eq.s32.totalorder %s29, 3
      %p106 = por %p104, %p105
      %p108 = scmp.ne.s32.totalorder %s93, %s107
      %p109 = scmp.eq.s32.totalorder %s29, 0
      %p110 = por %p108, %p109
      %s112 = sadd.s32 %s111, 1
      %p115 = scmp.eq.s32.totalorder %s23, 3
      %p116 = scmp.ne.s32.totalorder %s111, %s113
      %p117 = scmp.eq.s32.totalorder %s23, 0
      %p118 = por %p116, %p117
      %p119 = scmp.ne.s32.totalorder %s111, %s113
      %p120 = scmp.eq.s32.totalorder %s28, 3
      %p121 = por %p119, %p120
      %p122 = scmp.ne.s32.totalorder %s113, %s114
      %p123 = scmp.eq.s32.totalorder %s28, 0
      %p124 = por %p122, %p123
      %p125 = scmp.ne.s32.totalorder %s113, %s114
      %p126 = scmp.eq.s32.totalorder %s29, 3
      %p127 = por %p125, %p126
      %p129 = scmp.ne.s32.totalorder %s114, %s128
      %p130 = scmp.eq.s32.totalorder %s29, 0
      %p131 = por %p129, %p130
      %s133 = sadd.s32 %s132, 1
      %p136 = scmp.eq.s32.totalorder %s23, 3
      %p137 = scmp.ne.s32.totalorder %s132, %s134
      %p138 = scmp.eq.s32.totalorder %s23, 0
      %p139 = por %p137, %p138
      %p140 = scmp.ne.s32.totalorder %s132, %s134
      %p141 = scmp.eq.s32.totalorder %s28, 3
      %p142 = por %p140, %p141
      %p143 = scmp.ne.s32.totalorder %s134, %s135
      %p144 = scmp.eq.s32.totalorder %s28, 0
      %p145 = por %p143, %p144
      %p146 = scmp.ne.s32.totalorder %s134, %s135
      %p147 = scmp.eq.s32.totalorder %s29, 3
      %p148 = por %p146, %p147
      %p150 = scmp.ne.s32.totalorder %s135, %s149
      %p151 = scmp.eq.s32.totalorder %s29, 0
      %p152 = por %p150, %p151
      %s154 = sadd.s32 %s153, 1
      %p157 = scmp.eq.s32.totalorder %s23, 3
      %p158 = scmp.ne.s32.totalorder %s153, %s155
      %p159 = scmp.eq.s32.totalorder %s23, 0
      %p160 = por %p158, %p159
      %p161 = scmp.ne.s32.totalorder %s153, %s155
      %p162 = scmp.eq.s32.totalorder %s28, 3
      %p163 = por %p161, %p162
      %p164 = scmp.ne.s32.totalorder %s155, %s156
      %p165 = scmp.eq.s32.totalorder %s28, 0
      %p166 = por %p164, %p165
      %p167 = scmp.ne.s32.totalorder %s155, %s156
      %p168 = scmp.eq.s32.totalorder %s29, 3
      %p169 = por %p167, %p168
      %p171 = scmp.ne.s32.totalorder %s156, %s170
      %p172 = scmp.eq.s32.totalorder %s29, 0
      %p173 = por %p171, %p172
      %s175 = sadd.s32 %s174, 1
      %p178 = scmp.eq.s32.totalorder %s23, 3
      %p179 = scmp.ne.s32.totalorder %s174, %s176
      %p180 = scmp.eq.s32.totalorder %s23, 0
      %p181 = por %p179, %p180
      %p182 = scmp.ne.s32.totalorder %s174, %s176
      %p183 = scmp.eq.s32.totalorder %s28, 3
      %p184 = por %p182, %p183
      %p185 = scmp.ne.s32.totalorder %s176, %s177
      %p186 = scmp.eq.s32.totalorder %s28, 0
      %p187 = por %p185, %p186
      %p188 = scmp.ne.s32.totalorder %s176, %s177
      %p189 = scmp.eq.s32.totalorder %s29, 3
      %p190 = por %p188, %p189
      %p192 = scmp.ne.s32.totalorder %s177, %s191
      %p193 = scmp.eq.s32.totalorder %s29, 0
      %p194 = por %p192, %p193
      %s196 = sadd.s32 %s195, 1
      %p199 = scmp.eq.s32.totalorder %s23, 3
      %p200 = scmp.ne.s32.totalorder %s195, %s197
      %p201 = scmp.eq.s32.totalorder %s23, 0
      %p202 = por %p200, %p201
      %p203 = scmp.ne.s32.totalorder %s195, %s197
      %p204 = scmp.eq.s32.totalorder %s28, 3
      %p205 = por %p203, %p204
      %p206 = scmp.ne.s32.totalorder %s197, %s198
      %p207 = scmp.eq.s32.totalorder %s28, 0
      %p208 = por %p206, %p207
      %p209 = scmp.ne.s32.totalorder %s197, %s198
      %p210 = scmp.eq.s32.totalorder %s29, 3
      %p211 = por %p209, %p210
      %p213 = scmp.ne.s32.totalorder %s198, %s212
      %p214 = scmp.eq.s32.totalorder %s29, 0
      %p215 = por %p213, %p214
      %s217 = sadd.s32 %s216, 1
      %p220 = scmp.eq.s32.totalorder %s23, 3
      %p221 = scmp.ne.s32.totalorder %s216, %s218
      %p222 = scmp.eq.s32.totalorder %s23, 0
      %p223 = por %p221, %p222
      %p224 = scmp.ne.s32.totalorder %s216, %s218
      %p225 = scmp.eq.s32.totalorder %s28, 3
      %p226 = por %p224, %p225
      %p227 = scmp.ne.s32.totalorder %s218, %s219
      %p228 = scmp.eq.s32.totalorder %s28, 0
      %p229 = por %p227, %p228
      %p230 = scmp.ne.s32.totalorder %s218, %s219
      %p231 = scmp.eq.s32.totalorder %s29, 3
      %p232 = por %p230, %p231
      %p234 = scmp.ne.s32.totalorder %s219, %s233
      %p235 = scmp.eq.s32.totalorder %s29, 0
      %p236 = por %p234, %p235
      %s238 = sadd.s32 %s237, 1
      %p241 = scmp.eq.s32.totalorder %s23, 3
      %p242 = scmp.ne.s32.totalorder %s237, %s239
      %p243 = scmp.eq.s32.totalorder %s23, 0
      %p244 = por %p242, %p243
      %p245 = scmp.ne.s32.totalorder %s237, %s239
      %p246 = scmp.eq.s32.totalorder %s28, 3
      %p247 = por %p245, %p246
      %p248 = scmp.ne.s32.totalorder %s239, %s240
      %p249 = scmp.eq.s32.totalorder %s28, 0
      %p250 = por %p248, %p249
      %p251 = scmp.ne.s32.totalorder %s239, %s240
      %p252 = scmp.eq.s32.totalorder %s29, 3
      %p253 = por %p251, %p252
      %p255 = scmp.ne.s32.totalorder %s240, %s254
      %p256 = scmp.eq.s32.totalorder %s29, 0
      %p257 = por %p255, %p256
      %s259 = sadd.s32 %s258, 1
      %p262 = scmp.eq.s32.totalorder %s23, 3
      %p263 = scmp.ne.s32.totalorder %s258, %s260
      %p264 = scmp.eq.s32.totalorder %s23, 0
      %p265 = por %p263, %p264
      %p266 = scmp.ne.s32.totalorder %s258, %s260
      %p267 = scmp.eq.s32.totalorder %s28, 3
      %p268 = por %p266, %p267
      %p269 = scmp.ne.s32.totalorder %s260, %s261
      %p270 = scmp.eq.s32.totalorder %s28, 0
      %p271 = por %p269, %p270
      %p272 = scmp.ne.s32.totalorder %s260, %s261
      %p273 = scmp.eq.s32.totalorder %s29, 3
      %p274 = por %p272, %p273
      %p276 = scmp.ne.s32.totalorder %s261, %s275
      %p277 = scmp.eq.s32.totalorder %s29, 0
      %p278 = por %p276, %p277
      %s280 = sadd.s32 %s279, 1
      %p283 = scmp.eq.s32.totalorder %s23, 3
      %p284 = scmp.ne.s32.totalorder %s279, %s281
      %p285 = scmp.eq.s32.totalorder %s23, 0
      %p286 = por %p284, %p285
      %p287 = scmp.ne.s32.totalorder %s279, %s281
      %p288 = scmp.eq.s32.totalorder %s28, 3
      %p289 = por %p287, %p288
      %p290 = scmp.ne.s32.totalorder %s281, %s282
      %p291 = scmp.eq.s32.totalorder %s28, 0
      %p292 = por %p290, %p291
      %p293 = scmp.ne.s32.totalorder %s281, %s282
      %p294 = scmp.eq.s32.totalorder %s29, 3
      %p295 = por %p293, %p294
      %p297 = scmp.ne.s32.totalorder %s282, %s296
      %p298 = scmp.eq.s32.totalorder %s29, 0
      %p299 = por %p297, %p298
      %s301 = sadd.s32 %s300, 1
      %p304 = scmp.eq.s32.totalorder %s23, 3
      %p305 = scmp.ne.s32.totalorder %s300, %s302
      %p306 = scmp.eq.s32.totalorder %s23, 0
      %p307 = por %p305, %p306
      %p308 = scmp.ne.s32.totalorder %s300, %s302
      %p309 = scmp.eq.s32.totalorder %s28, 3
      %p310 = por %p308, %p309
      %p311 = scmp.ne.s32.totalorder %s302, %s303
      %p312 = scmp.eq.s32.totalorder %s28, 0
      %p313 = por %p311, %p312
      %p314 = scmp.ne.s32.totalorder %s302, %s303
      %p315 = scmp.eq.s32.totalorder %s29, 3
      %p316 = por %p314, %p315
      %p318 = scmp.ne.s32.totalorder %s303, %s317
      %p319 = scmp.eq.s32.totalorder %s29, 0
      %p320 = por %p318, %p319
      %s321 = ssub.s32 %s30, %s42
      %s322 = ssub.s32 %s31, %s38
      %s323 = sor.u32 %s321, %s322
      %p324 = scmp.eq.s32.totalorder %s323, 0
      %s326 = sadd.s32 %s325, 1
      %s327 = scalar_select %p324, %s325, %s326
      %p330 = pneg %p324
      %p331 = scmp.eq.s32.totalorder %s23, 3
      %p332 = por %p330, %p331
      %p333 = scmp.ne.s32.totalorder %s325, %s328
      %p334 = scmp.eq.s32.totalorder %s23, 0
      %p335 = por %p333, %p334
      %p336 = scmp.ne.s32.totalorder %s325, %s328
      %p337 = scmp.eq.s32.totalorder %s28, 3
      %p338 = por %p336, %p337
      %p339 = scmp.ne.s32.totalorder %s328, %s329
      %p340 = scmp.eq.s32.totalorder %s28, 0
      %p341 = por %p339, %p340
      %p342 = scmp.ne.s32.totalorder %s328, %s329
      %p343 = scmp.eq.s32.totalorder %s29, 3
      %p344 = por %p342, %p343
      %p346 = scmp.ne.s32.totalorder %s329, %s345
      %p347 = scmp.eq.s32.totalorder %s29, 0
      %p348 = por %p346, %p347
      %p349 = scmp.le.s32.totalorder 1, %s23
      %p350 = scmp.lt.s32.totalorder %s23, 5
      %p351 = pnand %p349, %p350
      %p352 = pneg %p351
      // Predicated region
      $region9: #{tpu_custom_call.1} parent=5 // pred_check
        _
      $region10: #{tpu_custom_call.1} parent=5 // pred_check_branch
        %354 = sbr.rel (%p351) target = $region12
      $region11: #{tpu_custom_call.1} parent=5 // pred_region
        %s355 = ssub.s32 %s23, 1
        // Predicated region
        $region13: #{tpu_custom_call.1} parent=11 // pred_check
          %p356 = pneg %p82
        $region14: #{tpu_custom_call.1} parent=11 // pred_check_branch
          %358 = sbr.rel (%p356) target = $region16
        $region15: #{tpu_custom_call.1} parent=11 // pred_region
          %360 = vsyncadd [#allocation6], 0
          %s362 = sshll.u32 %s1, 4
          %s363 = int_to_ptr.hbm [resolvable:$true] %s362
          %s364 = sshll.u32 [#allocation5], 4
          %s365 = int_to_ptr.vmem [resolvable:$true] %s364
          %367 = dma.hbm_to_vmem [thread:$0]  %s363, 16, %s365, [#allocation6]
        $region16: #{tpu_custom_call.1} parent=11 // pred_fallthru
          _
        // Predicated region
        $region17: #{tpu_custom_call.1} parent=11 // pred_check
          %p368 = pneg %p103
        $region18: #{tpu_custom_call.1} parent=11 // pred_check_branch
          %370 = sbr.rel (%p368) target = $region20
        $region19: #{tpu_custom_call.1} parent=11 // pred_region
          _
        $region20: #{tpu_custom_call.1} parent=11 // pred_fallthru
          _
        // Predicated region
        $region21: #{tpu_custom_call.1} parent=11 // pred_check
          %p371 = pneg %p124
        $region22: #{tpu_custom_call.1} parent=11 // pred_check_branch
          %373 = sbr.rel (%p371) target = $region24
        $region23: #{tpu_custom_call.1} parent=11 // pred_region
          _
        $region24: #{tpu_custom_call.1} parent=11 // pred_fallthru
          _
        // Predicated region
        $region25: #{tpu_custom_call.1} parent=11 // pred_check
          %p374 = pneg %p145
        $region26: #{tpu_custom_call.1} parent=11 // pred_check_branch
          %376 = sbr.rel (%p374) target = $region28
        $region27: #{tpu_custom_call.1} parent=11 // pred_region
          _
        $region28: #{tpu_custom_call.1} parent=11 // pred_fallthru
          _
        // Predicated region
        $region29: #{tpu_custom_call.1} parent=11 // pred_check
          %p377 = pneg %p166
        $region30: #{tpu_custom_call.1} parent=11 // pred_check_branch
          %379 = sbr.rel (%p377) target = $region32
        $region31: #{tpu_custom_call.1} parent=11 // pred_region
          _
        $region32: #{tpu_custom_call.1} parent=11 // pred_fallthru
          _
        // Predicated region
        $region33: #{tpu_custom_call.1} parent=11 // pred_check
          %p380 = pneg %p187
        $region34: #{tpu_custom_call.1} parent=11 // pred_check_branch
          %382 = sbr.rel (%p380) target = $region36
        $region35: #{tpu_custom_call.1} parent=11 // pred_region
          _
        $region36: #{tpu_custom_call.1} parent=11 // pred_fallthru
          _
        // Predicated region
        $region37: #{tpu_custom_call.1} parent=11 // pred_check
          %p383 = pneg %p208
        $region38: #{tpu_custom_call.1} parent=11 // pred_check_branch
          %385 = sbr.rel (%p383) target = $region40
        $region39: #{tpu_custom_call.1} parent=11 // pred_region
          _
        $region40: #{tpu_custom_call.1} parent=11 // pred_fallthru
          _
        // Predicated region
        $region41: #{tpu_custom_call.1} parent=11 // pred_check
          %p386 = pneg %p229
        $region42: #{tpu_custom_call.1} parent=11 // pred_check_branch
          %388 = sbr.rel (%p386) target = $region44
        $region43: #{tpu_custom_call.1} parent=11 // pred_region
          _
        $region44: #{tpu_custom_call.1} parent=11 // pred_fallthru
          _
        // Predicated region
        $region45: #{tpu_custom_call.1} parent=11 // pred_check
          %p389 = pneg %p250
        $region46: #{tpu_custom_call.1} parent=11 // pred_check_branch
          %391 = sbr.rel (%p389) target = $region48
        $region47: #{tpu_custom_call.1} parent=11 // pred_region
          _
        $region48: #{tpu_custom_call.1} parent=11 // pred_fallthru
          _
        // Predicated region
        $region49: #{tpu_custom_call.1} parent=11 // pred_check
          %p392 = pneg %p271
        $region50: #{tpu_custom_call.1} parent=11 // pred_check_branch
          %394 = sbr.rel (%p392) target = $region52
        $region51: #{tpu_custom_call.1} parent=11 // pred_region
          _
        $region52: #{tpu_custom_call.1} parent=11 // pred_fallthru
          _
        // Predicated region
        $region53: #{tpu_custom_call.1} parent=11 // pred_check
          %p395 = pneg %p292
        $region54: #{tpu_custom_call.1} parent=11 // pred_check_branch
          %397 = sbr.rel (%p395) target = $region56
        $region55: #{tpu_custom_call.1} parent=11 // pred_region
          _
        $region56: #{tpu_custom_call.1} parent=11 // pred_fallthru
          _
        // Predicated region
        $region57: #{tpu_custom_call.1} parent=11 // pred_check
          %p398 = pneg %p313
        $region58: #{tpu_custom_call.1} parent=11 // pred_check_branch
          %400 = sbr.rel (%p398) target = $region60
        $region59: #{tpu_custom_call.1} parent=11 // pred_region
          _
        $region60: #{tpu_custom_call.1} parent=11 // pred_fallthru
          _
      $region12: #{tpu_custom_call.1} parent=5 // pred_fallthru
        _
      %p401 = scmp.lt.s32.totalorder %s23, 4
      // Predicated region
      $region61: #{tpu_custom_call.1} parent=5 // pred_check
        %p402 = pneg %p401
      $region62: #{tpu_custom_call.1} parent=5 // pred_check_branch
        %404 = sbr.rel (%p402) target = $region64
      $region63: #{tpu_custom_call.1} parent=5 // pred_region
        // Predicated region
        $region65: #{tpu_custom_call.1} parent=63 // pred_check
          %p405 = pneg %p55
        $region66: #{tpu_custom_call.1} parent=63 // pred_check_branch
          %407 = sbr.rel (%p405) target = $region68
        $region67: #{tpu_custom_call.1} parent=63 // pred_region
          %p408 = scmp.lt.s32.totalorder %s30, 1
          %s409 = scalar_select %p408, %s30, 1
          %s410 = smul.addr %s409, 2
          %s411 = smul.addr %s410, 8
          %s412 = scalar_lea.vmem %s0, %s411
        $region68: #{tpu_custom_call.1} parent=63 // pred_fallthru
          _
      $region64: #{tpu_custom_call.1} parent=5 // pred_fallthru
        _
      %p413 = scmp.le.s32.totalorder 1, %s23
      %p414 = scmp.lt.s32.totalorder %s23, 5
      %p415 = pnand %p413, %p414
      %p416 = pneg %p415
      // Predicated region
      $region69: #{tpu_custom_call.1} parent=5 // pred_check
        _
      $region70: #{tpu_custom_call.1} parent=5 // pred_check_branch
        %418 = sbr.rel (%p415) target = $region72
      $region71: #{tpu_custom_call.1} parent=5 // pred_region
        %s419 = ssub.s32 %s23, 1
        // Predicated region
        $region73: #{tpu_custom_call.1} parent=71 // pred_check
          %p420 = pneg %p82
        $region74: #{tpu_custom_call.1} parent=71 // pred_check_branch
          %422 = sbr.rel (%p420) target = $region76
        $region75: #{tpu_custom_call.1} parent=71 // pred_region
          %424 = dma.done [#allocation6], 16
        $region76: #{tpu_custom_call.1} parent=71 // pred_fallthru
          _
        %p425 = scmp.lt.s32.totalorder %s32, 1
        %s426 = scalar_select %p425, %s32, 1
        %s427 = smul.addr %s426, 2
        %s428 = smul.addr %s427, 8
        %s429 = scalar_lea.vmem %s0, %s428
        %p430 = pneg %p61
        %p431 = pneg %p58
        %p432 = pneg %p82
        %p433 = pneg %p79
        %p434 = pneg %p103
        %p435 = pneg %p100
        %p436 = pneg %p124
        %p437 = pneg %p121
        %p438 = pneg %p145
        %p439 = pneg %p142
        %p440 = pneg %p166
        %p441 = pneg %p163
        %p442 = pneg %p187
        %p443 = pneg %p184
        %p444 = pneg %p208
        %p445 = pneg %p205
        %p446 = pneg %p229
        %p447 = pneg %p226
        %p448 = pneg %p250
        %p449 = pneg %p247
        %p450 = pneg %p271
        %p451 = pneg %p268
        %p452 = pneg %p292
        %p453 = pneg %p289
        %p454 = pneg %p313
        %p455 = pneg %p310
        %p456 = pneg %p341
        %p457 = pneg %p338
        %s458 = sand.u32 %s328, 1
        %s459 = scalar_lea.sflag [#allocation7], %s458
        %s460 = sand.u32 %s328, 1
        %s461 = smul.addr %s460, 8
        %s462 = scalar_lea.vmem [#allocation8], %s461
        %p463 = scmp.lt.s32.totalorder %s32, 1
        %s464 = scalar_select %p463, %s32, 1
        %s465 = smul.addr %s464, 2
        %s466 = smul.addr %s465, 8
        %s467 = scalar_lea.vmem %s0, %s466
        %p469 = scmp.eq.s32.totalorder %s33, 0
        // Predicated region
        $region77: #{tpu_custom_call.1} parent=71 // pred_check
          %p470 = pneg %p469
        $region78: #{tpu_custom_call.1} parent=71 // pred_check_branch
          %472 = sbr.rel (%p470) target = $region80
        $region79: #{tpu_custom_call.1} parent=71 // pred_region
          %v473 = vld [vmem:[%s467] sm:$0xff]
          %v474 = vld [vmem:[%s467 + $0x8] sm:$0xff]
          %v475 = vld [vmem:[#allocation5] sm:$0x1]
          %v476 = vld [vmem:[%s2] sm:$0x1]
          %vm477 = vcmask 261120
          %v478 = vsel %vm477, %v473, 0.0
          %479 = vadd.xlane.f32.xlu0 %v478
          %v480 = vpop.xlane.xlu0 %479
          %v481 = vsel %vm477, %v474, 0.0
          %482 = vadd.xlane.f32.xlu0 %v481
          %v483 = vpop.xlane.xlu0 %482
          %v484 = vrcp.pop 32.0
          %v485 = vmul.f32 32.0, %v484
          %v486 = vsub.f32 1.0, %v485
          %v487 = vmul.f32 %v484, %v486
          %v488 = vadd.f32 %v484, %v487
          %vm489 = vweird.f32 %v484
          %v490 = vsel %vm489, %v484, %v488
          %v491 = vmul.f32 %v480, %v490
          %v492 = vmul.f32 %v483, %v490
          %v493 = vsub.f32 %v473, %v491
          %v494 = vsub.f32 %v474, %v492
          %v495 = vmul.f32 %v493, %v493
          %v496 = vmul.f32 %v494, %v494
          %v497 = vsel %vm477, %v495, 0.0
          %498 = vadd.xlane.f32.xlu0 %v497
          %v499 = vpop.xlane.xlu0 %498
          %v500 = vsel %vm477, %v496, 0.0
          %501 = vadd.xlane.f32.xlu0 %v500
          %v502 = vpop.xlane.xlu0 %501
          %v503 = vmul.f32 %v499, %v490
          %v504 = vmul.f32 %v502, %v490
          %v505 = vadd.f32 %v503, 1e-05
          %v506 = vadd.f32 %v504, 1e-05
          %v507 = vrsqrt.pop %v505
          %v508 = vmul.f32 %v507, %v505
          %v509 = vmul.f32 %v508, %v507
          %v510 = vmul.f32 0.5, %v509
          %v511 = vsub.f32 1.5, %v510
          %v512 = vmul.f32 %v507, %v511
          %vm513 = vweird.f32 %v505
          %vm514 = vweird.f32 %v507
          %vm515 = vmor %vm513, %vm514
          %v516 = vsel %vm515, %v507, %v512
          %v517 = vrsqrt.pop %v506
          %v518 = vmul.f32 %v517, %v506
          %v519 = vmul.f32 %v518, %v517
          %v520 = vmul.f32 0.5, %v519
          %v521 = vsub.f32 1.5, %v520
          %v522 = vmul.f32 %v517, %v521
          %vm523 = vweird.f32 %v506
          %vm524 = vweird.f32 %v517
          %vm525 = vmor %vm523, %vm524
          %v526 = vsel %vm525, %v517, %v522
          %v527 = vmul.f32 %v493, %v516
          %v528 = vmul.f32 %v494, %v526
          %v530 = vperm.slane %v475, 0
          %v532 = vmul.f32 %v527, %v530
          %v533 = vmul.f32 %v528, %v530
          %v535 = vperm.slane %v476, 0
          %v537 = vadd.f32 %v532, %v535
          %v538 = vadd.f32 %v533, %v535
          %v539 = vpack.c.bf16 %v538, %v537
          %v540 = vld [vmem:[%s3] sm:$0xf]
          %v541 = vld [vmem:[%s3 + $0x4] sm:$0xf]
          %v542 = vld [vmem:[%s3 + $0x8] sm:$0xf]
          %v543 = vld [vmem:[%s3 + $0xc] sm:$0xf]
          %v544 = vld [vmem:[%s4] sm:$0x1]
          %v546 = vperm.slane %v544, 0
          %v552 = vunpack.c.l.b16 %v540
          %v553 = vunpack.c.l.b16 %v541
          %v554 = vunpack.c.l.b16 %v542
          %v555 = vunpack.c.l.b16 %v543
          %v556 = vpack.c.b16 %v553, %v552
          %v557 = vpack.c.b16 %v555, %v554
          %v561 = vsel %vm477, %v539, 0
          %563 = vmatpush.bf16.msra.mxu0 0
          %564 = vmatpush.bf16.msra.mxu0 0
          %565 = vmatpush.bf16.msra.mxu0 0
          %566 = vmatpush.bf16.msra.mxu0 0
          %567 = vmatpush.bf16.msra.mxu0 0
          %568 = vmatpush.bf16.msra.mxu0 0
          %569 = vmatpush.bf16.msra.mxu0 %v557
          %570 = vmatpush.bf16.msra.mxu0 %v556
          %571 = vmatmul.bf16.gmra.mxu0 %v561
          %v572 = vpop.f32.mrf.mxu0
          %v573 = vadd.f32 %v546, %v572
          %v574 = vpop.f32.mrf.mxu0
          %v575 = vadd.f32 %v546, %v574
          %576 = vdwg.mxu0
          %v577 = vpack.c.bf16 %v573, %v573
          %v578 = vpack.c.bf16 %v575, %v575
          %vm579 = vcmask 257024
          %580 = vst.msk [vmem:[#allocation2] sm:$0xf] %vm579, %v577
          %581 = vst.msk [vmem:[#allocation2 + $0x4] sm:$0xf] %vm579, %v578
          %584 = vrot.lane.b32.xlu0 %v577, 96
          %v585 = vpop.permute.xlu0 %584
          %586 = vrot.lane.b32.xlu0 %v578, 96
          %v587 = vpop.permute.xlu0 %586
          %590 = vst.msk [vmem:[#allocation3] sm:$0xf] %vm579, %v585
          %591 = vst.msk [vmem:[#allocation3 + $0x4] sm:$0xf] %vm579, %v587
          %592 = vrot.lane.b32.xlu0 %v577, 64
          %v593 = vpop.permute.xlu0 %592
          %594 = vrot.lane.b32.xlu0 %v578, 64
          %v595 = vpop.permute.xlu0 %594
          %598 = vst.msk [vmem:[#allocation4] sm:$0xf] %vm579, %v593
          %599 = vst.msk [vmem:[#allocation4 + $0x4] sm:$0xf] %vm579, %v595
        $region80: #{tpu_custom_call.1} parent=71 // pred_fallthru
          _
        %s600 = smul.u32 %s33, 8
        %s601 = scalar_lea.vmem %s467, %s600
        %v602 = vld [vmem:[%s601] sm:$0xff]
        %s603 = sshra.s32 %s600, 3
        %s604 = sand.u32 %s600, 7
        %s605 = smul.addr %s603, 4
        %s606 = scalar_lea.vmem [#allocation2], %s605
        %v607 = vld [vmem:[%s606] sm:$0xf]
        %v608 = vld [vmem:[#allocation3] sm:$0xf]
        %v609 = vld [vmem:[#allocation3 + $0x4] sm:$0xf]
        %v612 = vunpack.c.l.b16 %v608
        %v613 = vunpack.c.l.b16 %v609
        %v614 = vpack.c.b16 %v613, %v612
        %vm615 = vcmask 64512
        %v617 = vsel %vm615, %v607, 0
        %v620 = vsel %vm615, %v614, 0
        %622 = vmatpush.bf16.xpose.msra.mxu0 0
        %623 = vmatpush.bf16.xpose.msra.mxu0 0
        %624 = vmatpush.bf16.xpose.msra.mxu0 0
        %625 = vmatpush.bf16.xpose.msra.mxu0 0
        %626 = vmatpush.bf16.xpose.msra.mxu0 0
        %627 = vmatpush.bf16.xpose.msra.mxu0 0
        %628 = vmatpush.bf16.xpose.msra.mxu0 0
        %629 = vmatpush.bf16.xpose.msra.mxu0 %v620
        %630 = vmatmul.bf16.gmra.mxu0 %v617
        %v631 = vpop.f32.mrf.mxu0
        %v632 = vadd.f32 0.0, %v631
        %v633 = vpop.f32.mrf.mxu0
        %634 = vdwg.mxu0
        %vm635 = vcmask 130048
        %v636 = vsel %vm635, %v632, -inf
        %637 = vmax.xlane.f32.xlu0 %v636
        %v638 = vpop.xlane.xlu0 %637
        %v639 = vsub.f32 %v632, %v638
        %v640 = vmul.f32 %v639, 1.442695
        %v641 = vpow.pop %v640
        %v642 = vsel %vm635, %v641, 0.0
        %643 = vadd.xlane.f32.xlu0 %v642
        %v644 = vpop.xlane.xlu0 %643
        %v645 = vrcp.pop %v644
        %v646 = vmul.f32 %v641, %v645
        %v647 = vpack.c.bf16 %v646, %v646
        %v648 = vld [vmem:[#allocation4] sm:$0xf]
        %v649 = vld [vmem:[#allocation4 + $0x4] sm:$0xf]
        %v652 = vunpack.c.l.b16 %v648
        %v653 = vunpack.c.l.b16 %v649
        %v654 = vpack.c.b16 %v653, %v652
        %v657 = vsel %vm635, %v647, 0
        %659 = vmatpush.bf16.msra.mxu0 0
        %660 = vmatpush.bf16.msra.mxu0 0
        %661 = vmatpush.bf16.msra.mxu0 0
        %662 = vmatpush.bf16.msra.mxu0 0
        %663 = vmatpush.bf16.msra.mxu0 0
        %664 = vmatpush.bf16.msra.mxu0 0
        %665 = vmatpush.bf16.msra.mxu0 0
        %666 = vmatpush.bf16.msra.mxu0 %v654
        %667 = vmatmul.bf16.gmra.mxu0 %v657
        %v668 = vpop.f32.mrf.mxu0
        %v669 = vadd.f32 0.0, %v668
        %v670 = vpop.f32.mrf.mxu0
        %671 = vdwg.mxu0
        %v673 = vunpack.c.l.b16 %v607
        %v674 = vpack.c.b16 %v673, %v673
        %675 = vrot.lane.b32.xlu0 %v674, 120
        %v676 = vpop.permute.xlu0 %675
        %677 = vrot.lane.b32.xlu0 %v614, 120
        %v678 = vpop.permute.xlu0 %677
        %v680 = vsel %vm615, %v676, 0
        %v683 = vsel %vm615, %v678, 0
        %685 = vmatpush.bf16.xpose.msra.mxu0 0
        %686 = vmatpush.bf16.xpose.msra.mxu0 0
        %687 = vmatpush.bf16.xpose.msra.mxu0 0
        %688 = vmatpush.bf16.xpose.msra.mxu0 0
        %689 = vmatpush.bf16.xpose.msra.mxu0 0
        %690 = vmatpush.bf16.xpose.msra.mxu0 0
        %691 = vmatpush.bf16.xpose.msra.mxu0 0
        %692 = vmatpush.bf16.xpose.msra.mxu0 %v683
        %693 = vmatmul.bf16.gmra.mxu0 %v680
        %v694 = vpop.f32.mrf.mxu0
        %v695 = vadd.f32 0.0, %v694
        %v696 = vpop.f32.mrf.mxu0
        %697 = vdwg.mxu0
        %v698 = vsel %vm635, %v695, -inf
        %699 = vmax.xlane.f32.xlu0 %v698
        %v700 = vpop.xlane.xlu0 %699
        %v701 = vsub.f32 %v695, %v700
        %v702 = vmul.f32 %v701, 1.442695
        %v703 = vpow.pop %v702
        %v704 = vsel %vm635, %v703, 0.0
        %705 = vadd.xlane.f32.xlu0 %v704
        %v706 = vpop.xlane.xlu0 %705
        %v707 = vrcp.pop %v706
        %v708 = vmul.f32 %v703, %v707
        %v709 = vpack.c.bf16 %v708, %v708
        %710 = vrot.lane.b32.xlu0 %v654, 120
        %v711 = vpop.permute.xlu0 %710
        %v714 = vsel %vm635, %v709, 0
        %716 = vmatpush.bf16.msra.mxu0 0
        %717 = vmatpush.bf16.msra.mxu0 0
        %718 = vmatpush.bf16.msra.mxu0 0
        %719 = vmatpush.bf16.msra.mxu0 0
        %720 = vmatpush.bf16.msra.mxu0 0
        %721 = vmatpush.bf16.msra.mxu0 0
        %722 = vmatpush.bf16.msra.mxu0 0
        %723 = vmatpush.bf16.msra.mxu0 %v711
        %724 = vmatmul.bf16.gmra.mxu0 %v714
        %v725 = vpop.f32.mrf.mxu0
        %v726 = vadd.f32 0.0, %v725
        %v727 = vpop.f32.mrf.mxu0
        %728 = vdwg.mxu0
        %729 = vrot.lane.b32.xlu0 %v674, 112
        %v730 = vpop.permute.xlu0 %729
        %731 = vrot.lane.b32.xlu0 %v614, 112
        %v732 = vpop.permute.xlu0 %731
        %v734 = vsel %vm615, %v730, 0
        %v737 = vsel %vm615, %v732, 0
        %739 = vmatpush.bf16.xpose.msra.mxu0 0
        %740 = vmatpush.bf16.xpose.msra.mxu0 0
        %741 = vmatpush.bf16.xpose.msra.mxu0 0
        %742 = vmatpush.bf16.xpose.msra.mxu0 0
        %743 = vmatpush.bf16.xpose.msra.mxu0 0
        %744 = vmatpush.bf16.xpose.msra.mxu0 0
        %745 = vmatpush.bf16.xpose.msra.mxu0 0
        %746 = vmatpush.bf16.xpose.msra.mxu0 %v737
        %747 = vmatmul.bf16.gmra.mxu0 %v734
        %v748 = vpop.f32.mrf.mxu0
        %v749 = vadd.f32 0.0, %v748
        %v750 = vpop.f32.mrf.mxu0
        %751 = vdwg.mxu0
        %v752 = vsel %vm635, %v749, -inf
        %753 = vmax.xlane.f32.xlu0 %v752
        %v754 = vpop.xlane.xlu0 %753
        %v755 = vsub.f32 %v749, %v754
        %v756 = vmul.f32 %v755, 1.442695
        %v757 = vpow.pop %v756
        %v758 = vsel %vm635, %v757, 0.0
        %759 = vadd.xlane.f32.xlu0 %v758
        %v760 = vpop.xlane.xlu0 %759
        %v761 = vrcp.pop %v760
        %v762 = vmul.f32 %v757, %v761
        %v763 = vpack.c.bf16 %v762, %v762
        %764 = vrot.lane.b32.xlu0 %v654, 112
        %v765 = vpop.permute.xlu0 %764
        %v768 = vsel %vm635, %v763, 0
        %770 = vmatpush.bf16.msra.mxu0 0
        %771 = vmatpush.bf16.msra.mxu0 0
        %772 = vmatpush.bf16.msra.mxu0 0
        %773 = vmatpush.bf16.msra.mxu0 0
        %774 = vmatpush.bf16.msra.mxu0 0
        %775 = vmatpush.bf16.msra.mxu0 0
        %776 = vmatpush.bf16.msra.mxu0 0
        %777 = vmatpush.bf16.msra.mxu0 %v765
        %778 = vmatmul.bf16.gmra.mxu0 %v768
        %v779 = vpop.f32.mrf.mxu0
        %v780 = vadd.f32 0.0, %v779
        %v781 = vpop.f32.mrf.mxu0
        %782 = vdwg.mxu0
        %783 = vrot.lane.b32.xlu0 %v674, 104
        %v784 = vpop.permute.xlu0 %783
        %785 = vrot.lane.b32.xlu0 %v614, 104
        %v786 = vpop.permute.xlu0 %785
        %v788 = vsel %vm615, %v784, 0
        %v791 = vsel %vm615, %v786, 0
        %793 = vmatpush.bf16.xpose.msra.mxu0 0
        %794 = vmatpush.bf16.xpose.msra.mxu0 0
        %795 = vmatpush.bf16.xpose.msra.mxu0 0
        %796 = vmatpush.bf16.xpose.msra.mxu0 0
        %797 = vmatpush.bf16.xpose.msra.mxu0 0
        %798 = vmatpush.bf16.xpose.msra.mxu0 0
        %799 = vmatpush.bf16.xpose.msra.mxu0 0
        %800 = vmatpush.bf16.xpose.msra.mxu0 %v791
        %801 = vmatmul.bf16.gmra.mxu0 %v788
        %v802 = vpop.f32.mrf.mxu0
        %v803 = vadd.f32 0.0, %v802
        %v804 = vpop.f32.mrf.mxu0
        %805 = vdwg.mxu0
        %v806 = vsel %vm635, %v803, -inf
        %807 = vmax.xlane.f32.xlu0 %v806
        %v808 = vpop.xlane.xlu0 %807
        %v809 = vsub.f32 %v803, %v808
        %v810 = vmul.f32 %v809, 1.442695
        %v811 = vpow.pop %v810
        %v812 = vsel %vm635, %v811, 0.0
        %813 = vadd.xlane.f32.xlu0 %v812
        %v814 = vpop.xlane.xlu0 %813
        %v815 = vrcp.pop %v814
        %v816 = vmul.f32 %v811, %v815
        %v817 = vpack.c.bf16 %v816, %v816
        %818 = vrot.lane.b32.xlu0 %v654, 104
        %v819 = vpop.permute.xlu0 %818
        %v822 = vsel %vm635, %v817, 0
        %824 = vmatpush.bf16.msra.mxu0 0
        %825 = vmatpush.bf16.msra.mxu0 0
        %826 = vmatpush.bf16.msra.mxu0 0
        %827 = vmatpush.bf16.msra.mxu0 0
        %828 = vmatpush.bf16.msra.mxu0 0
        %829 = vmatpush.bf16.msra.mxu0 0
        %830 = vmatpush.bf16.msra.mxu0 0
        %831 = vmatpush.bf16.msra.mxu0 %v819
        %832 = vmatmul.bf16.gmra.mxu0 %v822
        %v833 = vpop.f32.mrf.mxu0
        %v834 = vadd.f32 0.0, %v833
        %v835 = vpop.f32.mrf.mxu0
        %836 = vdwg.mxu0
        %838 = vrot.lane.b32.xlu0 %v726, 8
        %v839 = vpop.permute.xlu0 %838
        %842 = vrot.lane.b32.xlu0 %v780, 16
        %v843 = vpop.permute.xlu0 %842
        %846 = vrot.lane.b32.xlu0 %v834, 24
        %v847 = vpop.permute.xlu0 %846
        %v849 = vsel %vm615, %v669, %v839
        %v850 = vsel %vm635, %v849, %v843
        %vm851 = vcmask 195584
        %v852 = vsel %vm851, %v850, %v847
        %v853 = vpack.c.bf16 %v852, %v852
        %v854 = vld [vmem:[%s5] sm:$0xf]
        %v855 = vld [vmem:[%s5 + $0x4] sm:$0xf]
        %v856 = vld [vmem:[%s5 + $0x8] sm:$0xf]
        %v857 = vld [vmem:[%s5 + $0xc] sm:$0xf]
        %v858 = vld [vmem:[%s6] sm:$0x1]
        %v860 = vperm.slane %v858, 0
        %v866 = vunpack.c.l.b16 %v854
        %v867 = vunpack.c.l.b16 %v855
        %v868 = vunpack.c.l.b16 %v856
        %v869 = vunpack.c.l.b16 %v857
        %v870 = vpack.c.b16 %v867, %v866
        %v871 = vpack.c.b16 %v869, %v868
        %vm874 = vcmask 261120
        %v876 = vsel %vm874, %v853, 0
        %878 = vmatpush.bf16.msra.mxu0 0
        %879 = vmatpush.bf16.msra.mxu0 0
        %880 = vmatpush.bf16.msra.mxu0 0
        %881 = vmatpush.bf16.msra.mxu0 0
        %882 = vmatpush.bf16.msra.mxu0 0
        %883 = vmatpush.bf16.msra.mxu0 0
        %884 = vmatpush.bf16.msra.mxu0 %v871
        %885 = vmatpush.bf16.msra.mxu0 %v870
        %886 = vmatmul.bf16.gmra.mxu0 %v876
        %v887 = vpop.f32.mrf.mxu0
        %v888 = vadd.f32 %v860, %v887
        %v889 = vpop.f32.mrf.mxu0
        %890 = vdwg.mxu0
        %v891 = vadd.f32 %v888, %v602
        %v892 = vld [vmem:[%s7] sm:$0x1]
        %v893 = vld [vmem:[%s8] sm:$0x1]
        %v894 = vsel %vm874, %v891, 0.0
        %895 = vadd.xlane.f32.xlu0 %v894
        %v896 = vpop.xlane.xlu0 %895
        %v897 = vrcp.pop 32.0
        %v898 = vmul.f32 32.0, %v897
        %v899 = vsub.f32 1.0, %v898
        %v900 = vmul.f32 %v897, %v899
        %v901 = vadd.f32 %v897, %v900
        %vm902 = vweird.f32 %v897
        %v903 = vsel %vm902, %v897, %v901
        %v904 = vmul.f32 %v896, %v903
        %v905 = vsub.f32 %v891, %v904
        %v906 = vmul.f32 %v905, %v905
        %v907 = vsel %vm874, %v906, 0.0
        %908 = vadd.xlane.f32.xlu0 %v907
        %v909 = vpop.xlane.xlu0 %908
        %v910 = vmul.f32 %v909, %v903
        %v911 = vadd.f32 %v910, 1e-05
        %v912 = vrsqrt.pop %v911
        %v913 = vmul.f32 %v912, %v911
        %v914 = vmul.f32 %v913, %v912
        %v915 = vmul.f32 0.5, %v914
        %v916 = vsub.f32 1.5, %v915
        %v917 = vmul.f32 %v912, %v916
        %vm918 = vweird.f32 %v911
        %vm919 = vweird.f32 %v912
        %vm920 = vmor %vm918, %vm919
        %v921 = vsel %vm920, %v912, %v917
        %v922 = vmul.f32 %v905, %v921
        %v924 = vperm.slane %v892, 0
        %v926 = vmul.f32 %v922, %v924
        %v928 = vperm.slane %v893, 0
        %v930 = vadd.f32 %v926, %v928
        %v931 = vpack.c.bf16 %v930, %v930
        %v932 = vld [vmem:[%s9] sm:$0xf]
        %v933 = vld [vmem:[%s9 + $0x4] sm:$0xf]
        %v934 = vld [vmem:[%s9 + $0x8] sm:$0xf]
        %v935 = vld [vmem:[%s9 + $0xc] sm:$0xf]
        %v936 = vld [vmem:[%s10] sm:$0x1]
        %v938 = vperm.slane %v936, 0
        %v944 = vunpack.c.l.b16 %v932
        %v945 = vunpack.c.l.b16 %v933
        %v946 = vunpack.c.l.b16 %v934
        %v947 = vunpack.c.l.b16 %v935
        %v948 = vpack.c.b16 %v945, %v944
        %v949 = vpack.c.b16 %v947, %v946
        %v953 = vsel %vm874, %v931, 0
        %955 = vmatpush.bf16.msra.mxu0 0
        %956 = vmatpush.bf16.msra.mxu0 0
        %957 = vmatpush.bf16.msra.mxu0 0
        %958 = vmatpush.bf16.msra.mxu0 0
        %959 = vmatpush.bf16.msra.mxu0 0
        %960 = vmatpush.bf16.msra.mxu0 0
        %961 = vmatpush.bf16.msra.mxu0 %v949
        %962 = vmatpush.bf16.msra.mxu0 %v948
        %963 = vmatmul.bf16.gmra.mxu0 %v953
        %v964 = vpop.f32.mrf.mxu0
        %v965 = vadd.f32 %v938, %v964
        %v966 = vpop.f32.mrf.mxu0
        %967 = vdwg.mxu0
        %v968 = vmul.f32 %v965, 0.5
        %v969 = vmul.f32 %v965, 0.70710677
        %v970 = vmul.f32 %v969, %v969
        %v971 = vmin.f32 16.0, %v970
        %v972 = vmul.f32 %v971, 2.1237322e-06
        %v973 = vadd.f32 %v972, 0.00028619796
        %v974 = vmul.f32 %v971, %v973
        %v975 = vadd.f32 %v974, 0.0036580483
        %v976 = vmul.f32 %v971, %v975
        %v977 = vadd.f32 %v976, 0.05243302
        %v978 = vmul.f32 %v971, %v977
        %v979 = vadd.f32 %v978, 0.18741608
        %v980 = vmul.f32 %v971, %v979
        %v981 = vadd.f32 %v980, 1.1283791
        %v982 = vmul.f32 %v969, %v981
        %v983 = vmul.f32 %v971, 3.8918573e-05
        %v984 = vadd.f32 %v983, 0.001143296
        %v985 = vmul.f32 %v971, %v984
        %v986 = vadd.f32 %v985, 0.014752088
        %v987 = vmul.f32 %v971, %v986
        %v988 = vadd.f32 %v987, 0.112945676
        %v989 = vmul.f32 %v971, %v988
        %v990 = vadd.f32 %v989, 0.4994258
        %v991 = vmul.f32 %v971, %v990
        %v992 = vadd.f32 %v991, 1.0
        %v993 = vrcp.pop %v992
        %v994 = vmul.f32 %v992, %v993
        %v995 = vsub.f32 1.0, %v994
        %v996 = vmul.f32 %v993, %v995
        %v997 = vadd.f32 %v993, %v996
        %vm998 = vweird.f32 %v992
        %vm999 = vweird.f32 %v993
        %vm1000 = vmor %vm998, %vm999
        %v1001 = vsel %vm1000, %v993, %v997
        %v1002 = vand.u32 2147483647, %v992
        %vm1003 = vcmp.eq.f32.partialorder %v1002, 8.507059e+37
        %v1004 = vand.u32 %v992, 2147483648
        %v1005 = vor.u32 1.1754944e-38, %v1004
        %v1006 = vsel %vm1003, %v1005, %v1001
        %v1007 = vmul.f32 %v982, %v1006
        %v1008 = vmin.f32 %v1007, 1.0
        %v1009 = vmax.f32 %v1008, -1.0
        %v1010 = vadd.f32 %v1009, 1.0
        %v1011 = vmul.f32 %v968, %v1010
        %v1012 = vpack.c.bf16 %v1011, %v1011
        %v1013 = vld [vmem:[%s11] sm:$0xf]
        %v1014 = vld [vmem:[%s11 + $0x4] sm:$0xf]
        %v1015 = vld [vmem:[%s11 + $0x8] sm:$0xf]
        %v1016 = vld [vmem:[%s11 + $0xc] sm:$0xf]
        %v1017 = vld [vmem:[%s11 + $0x10] sm:$0xf]
        %v1018 = vld [vmem:[%s11 + $0x14] sm:$0xf]
        %v1019 = vld [vmem:[%s11 + $0x18] sm:$0xf]
        %v1020 = vld [vmem:[%s11 + $0x1c] sm:$0xf]
        %v1021 = vld [vmem:[%s11 + $0x20] sm:$0xf]
        %v1022 = vld [vmem:[%s11 + $0x24] sm:$0xf]
        %v1023 = vld [vmem:[%s11 + $0x28] sm:$0xf]
        %v1024 = vld [vmem:[%s11 + $0x2c] sm:$0xf]
        %v1025 = vld [vmem:[%s11 + $0x30] sm:$0xf]
        %v1026 = vld [vmem:[%s11 + $0x34] sm:$0xf]
        %v1027 = vld [vmem:[%s11 + $0x38] sm:$0xf]
        %v1028 = vld [vmem:[%s11 + $0x3c] sm:$0xf]
        %v1029 = vld [vmem:[%s12] sm:$0x1]
        %v1031 = vperm.slane %v1029, 0
        %v1049 = vunpack.c.l.b16 %v1013
        %v1050 = vunpack.c.l.b16 %v1014
        %v1051 = vunpack.c.l.b16 %v1015
        %v1052 = vunpack.c.l.b16 %v1016
        %v1053 = vunpack.c.l.b16 %v1017
        %v1054 = vunpack.c.l.b16 %v1018
        %v1055 = vunpack.c.l.b16 %v1019
        %v1056 = vunpack.c.l.b16 %v1020
        %v1057 = vunpack.c.l.b16 %v1021
        %v1058 = vunpack.c.l.b16 %v1022
        %v1059 = vunpack.c.l.b16 %v1023
        %v1060 = vunpack.c.l.b16 %v1024
        %v1061 = vunpack.c.l.b16 %v1025
        %v1062 = vunpack.c.l.b16 %v1026
        %v1063 = vunpack.c.l.b16 %v1027
        %v1064 = vunpack.c.l.b16 %v1028
        %v1065 = vpack.c.b16 %v1050, %v1049
        %v1066 = vpack.c.b16 %v1052, %v1051
        %v1067 = vpack.c.b16 %v1054, %v1053
        %v1068 = vpack.c.b16 %v1056, %v1055
        %v1069 = vpack.c.b16 %v1058, %v1057
        %v1070 = vpack.c.b16 %v1060, %v1059
        %v1071 = vpack.c.b16 %v1062, %v1061
        %v1072 = vpack.c.b16 %v1064, %v1063
        %1081 = vmatpush.bf16.msra.mxu0 %v1072
        %1082 = vmatpush.bf16.msra.mxu0 %v1071
        %1083 = vmatpush.bf16.msra.mxu0 %v1070
        %1084 = vmatpush.bf16.msra.mxu0 %v1069
        %1085 = vmatpush.bf16.msra.mxu0 %v1068
        %1086 = vmatpush.bf16.msra.mxu0 %v1067
        %1087 = vmatpush.bf16.msra.mxu0 %v1066
        %1088 = vmatpush.bf16.msra.mxu0 %v1065
        %1089 = vmatmul.bf16.gmra.mxu0 %v1012
        %v1090 = vpop.f32.mrf.mxu0
        %v1091 = vadd.f32 %v1031, %v1090
        %v1092 = vpop.f32.mrf.mxu0
        %1093 = vdwg.mxu0
        %v1094 = vadd.f32 %v1091, %v891
        %1095 = vst.msk [vmem:[%s462] sm:$0xff] %vm874, %v1094
        %s1096 = sand.u32 %s328, 1
        %s1097 = scalar_lea.sflag [#allocation7], %s1096
        %s1098 = sand.u32 %s328, 1
        %s1099 = smul.addr %s1098, 8
        %s1100 = scalar_lea.vmem [#allocation8], %s1099
        // Predicated region
        $region81: #{tpu_custom_call.1} parent=71 // pred_check
          %p1101 = pneg %p338
        $region82: #{tpu_custom_call.1} parent=71 // pred_check_branch
          %1103 = sbr.rel (%p1101) target = $region84
        $region83: #{tpu_custom_call.1} parent=71 // pred_region
          %1105 = vsyncadd %s1097, 0
          %s1106 = smul.addr %s32, 2
          %s1107 = sadd.s32 %s33, %s1106
          %s1108 = smul.addr %s1107, 8
          %s1109 = scalar_lea.hbm %s13, %s1108
          %s1111 = sshll.u32 %s1100, 4
          %s1112 = int_to_ptr.vmem [resolvable:$true] %s1111
          %s1113 = sshll.u32 %s1109, 4
          %s1114 = int_to_ptr.hbm [resolvable:$true] %s1113
          %1116 = dma.vmem_to_hbm [thread:$0]  %s1112, 128, %s1114, %s1097
        $region84: #{tpu_custom_call.1} parent=71 // pred_fallthru
          _
      $region72: #{tpu_custom_call.1} parent=5 // pred_fallthru
        _
      %p1117 = scmp.le.s32.totalorder 2, %s23
      // Predicated region
      $region85: #{tpu_custom_call.1} parent=5 // pred_check
        %p1118 = pneg %p1117
      $region86: #{tpu_custom_call.1} parent=5 // pred_check_branch
        %1120 = sbr.rel (%p1118) target = $region88
      $region87: #{tpu_custom_call.1} parent=5 // pred_region
        %s1121 = ssub.s32 %s23, 2
        // Predicated region
        $region89: #{tpu_custom_call.1} parent=87 // pred_check
          %p1122 = pneg %p344
        $region90: #{tpu_custom_call.1} parent=87 // pred_check_branch
          %1124 = sbr.rel (%p1122) target = $region92
        $region91: #{tpu_custom_call.1} parent=87 // pred_region
          %s1125 = sand.u32 %s329, 1
          %s1126 = scalar_lea.sflag [#allocation7], %s1125
          %s1127 = sand.u32 %s329, 1
          %s1128 = smul.addr %s1127, 8
          %s1129 = scalar_lea.vmem [#allocation8], %s1128
          %1131 = dma.done %s1126, 128
        $region92: #{tpu_custom_call.1} parent=87 // pred_fallthru
          _
      $region88: #{tpu_custom_call.1} parent=5 // pred_fallthru
        _
    $region6: #{tpu_custom_call.1} parent=1 // loop_footer
      %s27 = sadd.s32 1, %s23
    $region7: #{tpu_custom_call.1} parent=1 // loop_footer_branch
      %22 = sbr.rel target = $region3
    $region8: #{tpu_custom_call.1} parent=1 // loop_exit
      _
    %1132 = vsyncpa [#allocation6], 1
    %s1133 = scalar_lea.sflag [#allocation6], 1
    %1134 = vsyncpa %s1133, 1
    %1135 = vsyncpa [#allocation7], 1
    %s1136 = scalar_lea.sflag [#allocation7], 1
    %1137 = vsyncpa %s1136, 1

</llo_original>
